<compile_context>
chip_gen: v7x
topology: tpu7x:2x2x1
jax: 0.10.0
libtpu: 0.0.40
codegen_flags: <defaults>
</compile_context>

<pallas_src>
import math

import jax
import jax.numpy as jnp
import numpy as np
from jax.experimental import pallas as pl
from jax.experimental.pallas import tpu as pltpu

INPUT_DIM = 80
HIDDEN = [64, 48, 32, 32]
OMIC_DIM = 32
LABEL_DIM_1 = 1
LABEL_DIM_2 = 2

LANES = 128
NUM_FUSED = 6            # L0 (enc0) + L1..L4 (fused encoders) + L5 (fused classifiers)
BIAS_LANE = LANES - 1    # constant-1 lane that carries folded biases

# lane offsets inside the packed (TB, 128) activation / output tile
_F1_OFF = 0              # branch-1 activations / features_1
_F2_OFF = 64             # branch-2 activations / features_2
_O1_OFF = 96             # out_1 (1 lane)
_O2_OFF = 97             # out_2 (2 lanes)
_BR2 = 64                # lane offset of branch 2


def _elu(x):
    # ELU(alpha=1). where() selects x for x > 0, so exp overflow in the
    # unselected branch is harmless. ELU(0)=0 and ELU(1)=1 keep the padded
    # lanes and the constant-1 bias lane exact through the whole network.
    return jnp.where(x > 0, x, jnp.exp(x) - 1.0)


def gsnn_kernel(x_ref, w0_ref, b_ref, w_ref, out_ref):
    """x_ref: (TB,80) f32 raw omic input block.
    w0_ref: (80,128) bf16 layer-0 weight (enc0 in cols 0:80).
    b_ref:  (2,1,128) f32 — [0]=enc0 bias (+1 at lane 127, seeds bias lane),
                             [1]=L2 bias  (+1 at lane 127, re-seeds it).
    w_ref:  (5,128,128) bf16 — L1..L5; biases folded into row 127 for
            L1/L3/L4/L5, bias-lane passthrough at [127,127] for L3/L4.
    out_ref:(TB,128) f32 packed [f1 | 0 | f2 | o1 | o2 | 0 | 1]."""
    w0 = w0_ref[...]
    b0 = b_ref[0]
    b2 = b_ref[1]

    def dot(h, w):
        # bf16 operands on the MXU, fp32 accumulate.
        return jnp.dot(h.astype(jnp.bfloat16), w,
                       preferred_element_type=jnp.float32)

    def chain(x):
        h = _elu(dot(x, w0) + b0)          # L0: 80 -> 80 (fp32 bias, bias lane = 1)
        h = _elu(dot(h, w_ref[0]))         # L1: 80 -> 64 + 64 (bias folded)
        h = _elu(dot(h, w_ref[1]) + b2)    # L2: 64 -> 48 per branch (fp32 bias)
        h = _elu(dot(h, w_ref[2]))         # L3: 48 -> 32 per branch (folded)
        feat = _elu(dot(h, w_ref[3]))      # L4: 32 -> 32: f1@0:32, f2@64:96
        cls = dot(feat, w_ref[4])          # L5: o1@96, o2@97:99 (folded bias)
        # feat and cls are nonzero on disjoint lanes -> one lane-dense tile.
        return feat + cls

    # Two independent chains over the two row halves: lets the scheduler
    # overlap MXU work of one half with EUP/VPU work of the other.
    half = x_ref.shape[0] // 2
    out_ref[:half, :] = chain(x_ref[:half, :])
    out_ref[half:, :] = chain(x_ref[half:, :])


def init_params(key):
    """Per-layer fp32 (w, b); w stored (in_features, out_features).
    Mimics init_max_weights: N(0, 1/sqrt(fan_in))."""
    def linear(k, fan_in, fan_out):
        kw, kb = jax.random.split(k)
        std = 1.0 / math.sqrt(fan_in)
        w = jax.random.normal(kw, (fan_in, fan_out), jnp.float32) * std
        b = jax.random.normal(kb, (fan_out,), jnp.float32) * std
        return w, b

    keys = jax.random.split(key, 11)
    enc0 = linear(keys[0], INPUT_DIM, INPUT_DIM)
    dims = [(INPUT_DIM, HIDDEN[0]), (HIDDEN[0], HIDDEN[1]),
            (HIDDEN[1], HIDDEN[2]), (HIDDEN[2], OMIC_DIM)]
    branch1 = [linear(keys[1 + i], fi, fo) for i, (fi, fo) in enumerate(dims)]
    branch2 = [linear(keys[5 + i], fi, fo) for i, (fi, fo) in enumerate(dims)]
    cls1 = linear(keys[9], OMIC_DIM, LABEL_DIM_1)
    cls2 = linear(keys[10], OMIC_DIM, LABEL_DIM_2)
    return enc0, branch1, branch2, cls1, cls2


def pack_params(params):
    """Pack the 11 Linear layers into:
       w0 (80,128) bf16, biases (2,1,128) f32, w_rest (5,128,128) bf16.
    Branch1 lives in lanes [0,64), branch2 in [64,128); classifiers at
    lanes 96..98; biases for L1/L3/L4/L5 folded into weight row 127."""
    enc0, branch1, branch2, cls1, cls2 = params
    W0 = np.zeros((INPUT_DIM, LANES), np.float32)
    BI = np.zeros((2, 1, LANES), np.float32)
    WR = np.zeros((NUM_FUSED - 1, LANES, LANES), np.float32)

    # L0: enc0 (80 -> 80), fp32 bias; bias lane seeded to 1.
    w0, b0 = enc0
    W0[:, :INPUT_DIM] = np.asarray(w0)
    BI[0, 0, :INPUT_DIM] = np.asarray(b0)
    BI[0, 0, BIAS_LANE] = 1.0

    # L1: both branches read the same 80-wide enc0 activation -> [w11 | w21];
    # biases folded into row 127 (output is fully packed 64+64, no bias lane).
    (w11, b11), (w21, b21) = branch1[0], branch2[0]
    WR[0, :INPUT_DIM, 0:HIDDEN[0]] = np.asarray(w11)
    WR[0, :INPUT_DIM, _BR2:_BR2 + HIDDEN[0]] = np.asarray(w21)
    WR[0, BIAS_LANE, 0:HIDDEN[0]] = np.asarray(b11)
    WR[0, BIAS_LANE, _BR2:_BR2 + HIDDEN[0]] = np.asarray(b21)

    # L2: block-diagonal 64 -> 48 per branch; explicit fp32 bias which also
    # re-seeds the constant-1 bias lane.
    (w12, b12), (w22, b22) = branch1[1], branch2[1]
    WR[1, 0:HIDDEN[0], 0:HIDDEN[1]] = np.asarray(w12)
    WR[1, _BR2:_BR2 + HIDDEN[0], _BR2:_BR2 + HIDDEN[1]] = np.asarray(w22)
    BI[1, 0, 0:HIDDEN[1]] = np.asarray(b12)
    BI[1, 0, _BR2:_BR2 + HIDDEN[1]] = np.asarray(b22)
    BI[1, 0, BIAS_LANE] = 1.0

    # L3 / L4: block-diagonal, biases folded, bias-lane passthrough.
    in_dims = [HIDDEN[1], HIDDEN[2]]     # 48, 32
    out_dims = [HIDDEN[2], OMIC_DIM]     # 32, 32
    for k in range(2):
        (w1, b1), (w2, b2) = branch1[2 + k], branch2[2 + k]
        fi, fo = in_dims[k], out_dims[k]
        WR[2 + k, 0:fi, 0:fo] = np.asarray(w1)
        WR[2 + k, _BR2:_BR2 + fi, _BR2:_BR2 + fo] = np.asarray(w2)
        WR[2 + k, BIAS_LANE, 0:fo] = np.asarray(b1)
        WR[2 + k, BIAS_LANE, _BR2:_BR2 + fo] = np.asarray(b2)
        WR[2 + k, BIAS_LANE, BIAS_LANE] = 1.0

    # L5: fused classifiers; biases folded; no bias-lane passthrough needed.
    (wc1, bc1), (wc2, bc2) = cls1, cls2
    WR[4, 0:OMIC_DIM, _O1_OFF:_O1_OFF + LABEL_DIM_1] = np.asarray(wc1)
    WR[4, _BR2:_BR2 + OMIC_DIM, _O2_OFF:_O2_OFF + LABEL_DIM_2] = np.asarray(wc2)
    WR[4, BIAS_LANE, _O1_OFF:_O1_OFF + LABEL_DIM_1] = np.asarray(bc1)
    WR[4, BIAS_LANE, _O2_OFF:_O2_OFF + LABEL_DIM_2] = np.asarray(bc2)

    return (jnp.asarray(W0, jnp.bfloat16),
            jnp.asarray(BI, jnp.float32),
            jnp.asarray(WR, jnp.bfloat16))


def _round_up(n, m):
    return ((n + m - 1) // m) * m


def gsnn_forward(x_omic, w0_packed, b_packed, w_packed, *, block_rows=128):
    """Returns (features_1, features_2, out_1, out_2)."""
    batch = x_omic.shape[0]
    # Batch tile: multiple of 16 (so each interleaved half is sublane-aligned),
    # capped at block_rows. Pad the batch up to a multiple of the tile.
    tb = min(_round_up(block_rows, 16), _round_up(max(batch, 1), 16))
    pb = _round_up(batch, tb)

    x = x_omic.astype(jnp.float32)
    if pb != batch:
        x = jnp.pad(x, ((0, pb - batch), (0, 0)))   # zero rows: safe, sliced off

    packed = pl.pallas_call(
        gsnn_kernel,
        out_shape=jax.ShapeDtypeStruct((pb, LANES), jnp.float32),
        grid=(pb // tb,),
        in_specs=[
            pl.BlockSpec((tb, INPUT_DIM), lambda i: (i, 0)),
            # constant block indices -> param slabs DMA'd once, stay resident
            pl.BlockSpec((INPUT_DIM, LANES), lambda i: (0, 0)),
            pl.BlockSpec((2, 1, LANES), lambda i: (0, 0, 0)),
            pl.BlockSpec((NUM_FUSED - 1, LANES, LANES), lambda i: (0, 0, 0)),
        ],
        out_specs=pl.BlockSpec((tb, LANES), lambda i: (i, 0)),
        compiler_params=pltpu.CompilerParams(
            dimension_semantics=("parallel",)),
    )(x, w0_packed, b_packed, w_packed)

    features_1 = packed[:batch, _F1_OFF:_F1_OFF + OMIC_DIM]
    features_2 = packed[:batch, _F2_OFF:_F2_OFF + OMIC_DIM]
    out_1 = packed[:batch, _O1_OFF:_O1_OFF + LABEL_DIM_1]
    out_2 = packed[:batch, _O2_OFF:_O2_OFF + LABEL_DIM_2]
    return features_1, features_2, out_1, out_2


def reference_forward(x, params):
    """Plain-JAX fp32 reference using the unfused per-layer params."""
    enc0, branch1, branch2, cls1, cls2 = params

    def elu(v):
        return jnp.where(v > 0, v, jnp.exp(v) - 1.0)

    h = elu(x @ enc0[0] + enc0[1])
    h1 = h
    for w, b in branch1:
        h1 = elu(h1 @ w + b)
    h2 = h
    for w, b in branch2:
        h2 = elu(h2 @ w + b)
    o1 = h1 @ cls1[0] + cls1[1]
    o2 = h2 @ cls2[0] + cls2[1]
    return h1, h2, o1, o2


if __name__ == "__main__":
    key = jax.random.PRNGKey(0)
    kx, kp = jax.random.split(key)

    batch = 8
    x_omic = jax.random.normal(kx, (batch, INPUT_DIM), jnp.float32)
    params = init_params(kp)
    w0_packed, b_packed, w_packed = pack_params(params)

    outs = jax.block_until_ready(
        gsnn_forward(x_omic, w0_packed, b_packed, w_packed))
    features_1, features_2, out_1, out_2 = outs

    assert features_1.shape == (batch, OMIC_DIM)
    assert features_2.shape == (batch, OMIC_DIM)
    assert out_1.shape == (batch, LABEL_DIM_1)
    assert out_2.shape == (batch, LABEL_DIM_2)

    # Loose tolerance: kernel uses bf16 weights (and bf16 folded biases for
    # 4 of 6 layers) at the dot boundaries; reference is full fp32.
    refs = reference_forward(x_omic, params)
    for got, want in zip(outs, refs):
        got_np, want_np = np.asarray(got), np.asarray(want)
        assert np.allclose(got_np, want_np, rtol=1e-1, atol=1e-1), (
            float(np.max(np.abs(got_np - want_np))))

    print("KERNEL_OK")
</pallas_src>

<mosaic_0001>
module attributes {stable_mosaic.version = 11 : i64} {
  func.func @gsnn_kernel(%arg0: i32, %arg1: memref<16x80xf32, #tpu.memory_space<vmem>>, %arg2: memref<80x128xbf16, #tpu.memory_space<vmem>>, %arg3: memref<2x1x128xf32, #tpu.memory_space<vmem>>, %arg4: memref<5x128x128xbf16, #tpu.memory_space<vmem>>, %arg5: memref<16x128xf32, #tpu.memory_space<vmem>>) attributes {dimension_semantics = [#tpu.dimension_semantics<parallel>], iteration_bounds = array<i64: 1>, scalar_prefetch = 0 : i64, scratch_operands = 0 : i64, tpu.core_type = #tpu.core_type<tc>, window_params = [{transform_indices = @transform_0, window_bounds = array<i64: 16, 80>}, {pipeline_mode = #tpu.pipeline_mode<synchronous>, transform_indices = @transform_1, window_bounds = array<i64: 80, 128>}, {pipeline_mode = #tpu.pipeline_mode<synchronous>, transform_indices = @transform_2, window_bounds = array<i64: 2, 1, 128>}, {pipeline_mode = #tpu.pipeline_mode<synchronous>, transform_indices = @transform_3, window_bounds = array<i64: 5, 128, 128>}, {transform_indices = @transform_4, window_bounds = array<i64: 16, 128>}]} {
    %c0 = arith.constant 0 : index
    %c0_0 = arith.constant 0 : index
    %0 = vector.load %arg2[%c0, %c0_0] : memref<80x128xbf16, #tpu.memory_space<vmem>>, vector<80x128xbf16>
    %c0_1 = arith.constant 0 : index
    %c0_2 = arith.constant 0 : index
    %c0_3 = arith.constant 0 : index
    %1 = vector.load %arg3[%c0_1, %c0_2, %c0_3] : memref<2x1x128xf32, #tpu.memory_space<vmem>>, vector<1x1x128xf32>
    %2 = vector.shape_cast %1 : vector<1x1x128xf32> to vector<1x128xf32>
    %c1 = arith.constant 1 : index
    %c0_4 = arith.constant 0 : index
    %c0_5 = arith.constant 0 : index
    %3 = vector.load %arg3[%c1, %c0_4, %c0_5] : memref<2x1x128xf32, #tpu.memory_space<vmem>>, vector<1x1x128xf32>
    %4 = vector.shape_cast %3 : vector<1x1x128xf32> to vector<1x128xf32>
    %c0_6 = arith.constant 0 : index
    %c0_7 = arith.constant 0 : index
    %5 = vector.load %arg1[%c0_6, %c0_7] : memref<16x80xf32, #tpu.memory_space<vmem>>, vector<8x80xf32>
    %6 = arith.truncf %5 : vector<8x80xf32> to vector<8x80xbf16>
    %cst = arith.constant dense<0.000000e+00> : vector<8x128xf32>
    %7 = tpu.matmul %6, %0, %cst {dimension_numbers = #tpu.dot_dimension_numbers<[1], [0], [0], [1], [0, 0, 1, 1], [], []>} : vector<8x80xbf16>, vector<80x128xbf16>, vector<8x128xf32> -> vector<8x128xf32>
    %8 = vector.broadcast %2 : vector<1x128xf32> to vector<8x128xf32>
    %9 = arith.addf %7, %8 : vector<8x128xf32>
    %cst_8 = arith.constant 0.000000e+00 : f32
    %10 = vector.broadcast %cst_8 : f32 to vector<8x128xf32>
    %11 = arith.cmpf ogt, %9, %10 : vector<8x128xf32>
    %12 = math.exp %9 : vector<8x128xf32>
    %cst_9 = arith.constant 1.000000e+00 : f32
    %13 = vector.broadcast %cst_9 : f32 to vector<8x128xf32>
    %14 = arith.subf %12, %13 : vector<8x128xf32>
    %15 = arith.select %11, %9, %14 : vector<8x128xi1>, vector<8x128xf32>
    %c0_10 = arith.constant 0 : index
    %c0_11 = arith.constant 0 : index
    %c0_12 = arith.constant 0 : index
    %16 = vector.load %arg4[%c0_10, %c0_11, %c0_12] : memref<5x128x128xbf16, #tpu.memory_space<vmem>>, vector<1x128x128xbf16>
    %17 = vector.shape_cast %16 : vector<1x128x128xbf16> to vector<128x128xbf16>
    %18 = arith.truncf %15 : vector<8x128xf32> to vector<8x128xbf16>
    %cst_13 = arith.constant dense<0.000000e+00> : vector<8x128xf32>
    %19 = tpu.matmul %18, %17, %cst_13 {dimension_numbers = #tpu.dot_dimension_numbers<[1], [0], [0], [1], [0, 0, 1, 1], [], []>} : vector<8x128xbf16>, vector<128x128xbf16>, vector<8x128xf32> -> vector<8x128xf32>
    %cst_14 = arith.constant 0.000000e+00 : f32
    %20 = vector.broadcast %cst_14 : f32 to vector<8x128xf32>
    %21 = arith.cmpf ogt, %19, %20 : vector<8x128xf32>
    %22 = math.exp %19 : vector<8x128xf32>
    %cst_15 = arith.constant 1.000000e+00 : f32
    %23 = vector.broadcast %cst_15 : f32 to vector<8x128xf32>
    %24 = arith.subf %22, %23 : vector<8x128xf32>
    %25 = arith.select %21, %19, %24 : vector<8x128xi1>, vector<8x128xf32>
    %c1_16 = arith.constant 1 : index
    %c0_17 = arith.constant 0 : index
    %c0_18 = arith.constant 0 : index
    %26 = vector.load %arg4[%c1_16, %c0_17, %c0_18] : memref<5x128x128xbf16, #tpu.memory_space<vmem>>, vector<1x128x128xbf16>
    %27 = vector.shape_cast %26 : vector<1x128x128xbf16> to vector<128x128xbf16>
    %28 = arith.truncf %25 : vector<8x128xf32> to vector<8x128xbf16>
    %cst_19 = arith.constant dense<0.000000e+00> : vector<8x128xf32>
    %29 = tpu.matmul %28, %27, %cst_19 {dimension_numbers = #tpu.dot_dimension_numbers<[1], [0], [0], [1], [0, 0, 1, 1], [], []>} : vector<8x128xbf16>, vector<128x128xbf16>, vector<8x128xf32> -> vector<8x128xf32>
    %30 = vector.broadcast %4 : vector<1x128xf32> to vector<8x128xf32>
    %31 = arith.addf %29, %30 : vector<8x128xf32>
    %cst_20 = arith.constant 0.000000e+00 : f32
    %32 = vector.broadcast %cst_20 : f32 to vector<8x128xf32>
    %33 = arith.cmpf ogt, %31, %32 : vector<8x128xf32>
    %34 = math.exp %31 : vector<8x128xf32>
    %cst_21 = arith.constant 1.000000e+00 : f32
    %35 = vector.broadcast %cst_21 : f32 to vector<8x128xf32>
    %36 = arith.subf %34, %35 : vector<8x128xf32>
    %37 = arith.select %33, %31, %36 : vector<8x128xi1>, vector<8x128xf32>
    %c2 = arith.constant 2 : index
    %c0_22 = arith.constant 0 : index
    %c0_23 = arith.constant 0 : index
    %38 = vector.load %arg4[%c2, %c0_22, %c0_23] : memref<5x128x128xbf16, #tpu.memory_space<vmem>>, vector<1x128x128xbf16>
    %39 = vector.shape_cast %38 : vector<1x128x128xbf16> to vector<128x128xbf16>
    %40 = arith.truncf %37 : vector<8x128xf32> to vector<8x128xbf16>
    %cst_24 = arith.constant dense<0.000000e+00> : vector<8x128xf32>
    %41 = tpu.matmul %40, %39, %cst_24 {dimension_numbers = #tpu.dot_dimension_numbers<[1], [0], [0], [1], [0, 0, 1, 1], [], []>} : vector<8x128xbf16>, vector<128x128xbf16>, vector<8x128xf32> -> vector<8x128xf32>
    %cst_25 = arith.constant 0.000000e+00 : f32
    %42 = vector.broadcast %cst_25 : f32 to vector<8x128xf32>
    %43 = arith.cmpf ogt, %41, %42 : vector<8x128xf32>
    %44 = math.exp %41 : vector<8x128xf32>
    %cst_26 = arith.constant 1.000000e+00 : f32
    %45 = vector.broadcast %cst_26 : f32 to vector<8x128xf32>
    %46 = arith.subf %44, %45 : vector<8x128xf32>
    %47 = arith.select %43, %41, %46 : vector<8x128xi1>, vector<8x128xf32>
    %c3 = arith.constant 3 : index
    %c0_27 = arith.constant 0 : index
    %c0_28 = arith.constant 0 : index
    %48 = vector.load %arg4[%c3, %c0_27, %c0_28] : memref<5x128x128xbf16, #tpu.memory_space<vmem>>, vector<1x128x128xbf16>
    %49 = vector.shape_cast %48 : vector<1x128x128xbf16> to vector<128x128xbf16>
    %50 = arith.truncf %47 : vector<8x128xf32> to vector<8x128xbf16>
    %cst_29 = arith.constant dense<0.000000e+00> : vector<8x128xf32>
    %51 = tpu.matmul %50, %49, %cst_29 {dimension_numbers = #tpu.dot_dimension_numbers<[1], [0], [0], [1], [0, 0, 1, 1], [], []>} : vector<8x128xbf16>, vector<128x128xbf16>, vector<8x128xf32> -> vector<8x128xf32>
    %cst_30 = arith.constant 0.000000e+00 : f32
    %52 = vector.broadcast %cst_30 : f32 to vector<8x128xf32>
    %53 = arith.cmpf ogt, %51, %52 : vector<8x128xf32>
    %54 = math.exp %51 : vector<8x128xf32>
    %cst_31 = arith.constant 1.000000e+00 : f32
    %55 = vector.broadcast %cst_31 : f32 to vector<8x128xf32>
    %56 = arith.subf %54, %55 : vector<8x128xf32>
    %57 = arith.select %53, %51, %56 : vector<8x128xi1>, vector<8x128xf32>
    %c4 = arith.constant 4 : index
    %c0_32 = arith.constant 0 : index
    %c0_33 = arith.constant 0 : index
    %58 = vector.load %arg4[%c4, %c0_32, %c0_33] : memref<5x128x128xbf16, #tpu.memory_space<vmem>>, vector<1x128x128xbf16>
    %59 = vector.shape_cast %58 : vector<1x128x128xbf16> to vector<128x128xbf16>
    %60 = arith.truncf %57 : vector<8x128xf32> to vector<8x128xbf16>
    %cst_34 = arith.constant dense<0.000000e+00> : vector<8x128xf32>
    %61 = tpu.matmul %60, %59, %cst_34 {dimension_numbers = #tpu.dot_dimension_numbers<[1], [0], [0], [1], [0, 0, 1, 1], [], []>} : vector<8x128xbf16>, vector<128x128xbf16>, vector<8x128xf32> -> vector<8x128xf32>
    %62 = arith.addf %57, %61 : vector<8x128xf32>
    %c0_35 = arith.constant 0 : index
    %c0_36 = arith.constant 0 : index
    %63 = vector.load %arg5[%c0_35, %c0_36] : memref<16x128xf32, #tpu.memory_space<vmem>>, vector<8x128xf32>
    tpu.vector_store %arg5[%c0_35, %c0_36], %62 {strides = array<i32>} : memref<16x128xf32, #tpu.memory_space<vmem>>, vector<8x128xf32>,
    %c8 = arith.constant 8 : index
    %c0_37 = arith.constant 0 : index
    %64 = vector.load %arg1[%c8, %c0_37] : memref<16x80xf32, #tpu.memory_space<vmem>>, vector<8x80xf32>
    %65 = arith.truncf %64 : vector<8x80xf32> to vector<8x80xbf16>
    %cst_38 = arith.constant dense<0.000000e+00> : vector<8x128xf32>
    %66 = tpu.matmul %65, %0, %cst_38 {dimension_numbers = #tpu.dot_dimension_numbers<[1], [0], [0], [1], [0, 0, 1, 1], [], []>} : vector<8x80xbf16>, vector<80x128xbf16>, vector<8x128xf32> -> vector<8x128xf32>
    %67 = vector.broadcast %2 : vector<1x128xf32> to vector<8x128xf32>
    %68 = arith.addf %66, %67 : vector<8x128xf32>
    %cst_39 = arith.constant 0.000000e+00 : f32
    %69 = vector.broadcast %cst_39 : f32 to vector<8x128xf32>
    %70 = arith.cmpf ogt, %68, %69 : vector<8x128xf32>
    %71 = math.exp %68 : vector<8x128xf32>
    %cst_40 = arith.constant 1.000000e+00 : f32
    %72 = vector.broadcast %cst_40 : f32 to vector<8x128xf32>
    %73 = arith.subf %71, %72 : vector<8x128xf32>
    %74 = arith.select %70, %68, %73 : vector<8x128xi1>, vector<8x128xf32>
    %c0_41 = arith.constant 0 : index
    %c0_42 = arith.constant 0 : index
    %c0_43 = arith.constant 0 : index
    %75 = vector.load %arg4[%c0_41, %c0_42, %c0_43] : memref<5x128x128xbf16, #tpu.memory_space<vmem>>, vector<1x128x128xbf16>
    %76 = vector.shape_cast %75 : vector<1x128x128xbf16> to vector<128x128xbf16>
    %77 = arith.truncf %74 : vector<8x128xf32> to vector<8x128xbf16>
    %cst_44 = arith.constant dense<0.000000e+00> : vector<8x128xf32>
    %78 = tpu.matmul %77, %76, %cst_44 {dimension_numbers = #tpu.dot_dimension_numbers<[1], [0], [0], [1], [0, 0, 1, 1], [], []>} : vector<8x128xbf16>, vector<128x128xbf16>, vector<8x128xf32> -> vector<8x128xf32>
    %cst_45 = arith.constant 0.000000e+00 : f32
    %79 = vector.broadcast %cst_45 : f32 to vector<8x128xf32>
    %80 = arith.cmpf ogt, %78, %79 : vector<8x128xf32>
    %81 = math.exp %78 : vector<8x128xf32>
    %cst_46 = arith.constant 1.000000e+00 : f32
    %82 = vector.broadcast %cst_46 : f32 to vector<8x128xf32>
    %83 = arith.subf %81, %82 : vector<8x128xf32>
    %84 = arith.select %80, %78, %83 : vector<8x128xi1>, vector<8x128xf32>
    %c1_47 = arith.constant 1 : index
    %c0_48 = arith.constant 0 : index
    %c0_49 = arith.constant 0 : index
    %85 = vector.load %arg4[%c1_47, %c0_48, %c0_49] : memref<5x128x128xbf16, #tpu.memory_space<vmem>>, vector<1x128x128xbf16>
    %86 = vector.shape_cast %85 : vector<1x128x128xbf16> to vector<128x128xbf16>
    %87 = arith.truncf %84 : vector<8x128xf32> to vector<8x128xbf16>
    %cst_50 = arith.constant dense<0.000000e+00> : vector<8x128xf32>
    %88 = tpu.matmul %87, %86, %cst_50 {dimension_numbers = #tpu.dot_dimension_numbers<[1], [0], [0], [1], [0, 0, 1, 1], [], []>} : vector<8x128xbf16>, vector<128x128xbf16>, vector<8x128xf32> -> vector<8x128xf32>
    %89 = vector.broadcast %4 : vector<1x128xf32> to vector<8x128xf32>
    %90 = arith.addf %88, %89 : vector<8x128xf32>
    %cst_51 = arith.constant 0.000000e+00 : f32
    %91 = vector.broadcast %cst_51 : f32 to vector<8x128xf32>
    %92 = arith.cmpf ogt, %90, %91 : vector<8x128xf32>
    %93 = math.exp %90 : vector<8x128xf32>
    %cst_52 = arith.constant 1.000000e+00 : f32
    %94 = vector.broadcast %cst_52 : f32 to vector<8x128xf32>
    %95 = arith.subf %93, %94 : vector<8x128xf32>
    %96 = arith.select %92, %90, %95 : vector<8x128xi1>, vector<8x128xf32>
    %c2_53 = arith.constant 2 : index
    %c0_54 = arith.constant 0 : index
    %c0_55 = arith.constant 0 : index
    %97 = vector.load %arg4[%c2_53, %c0_54, %c0_55] : memref<5x128x128xbf16, #tpu.memory_space<vmem>>, vector<1x128x128xbf16>
    %98 = vector.shape_cast %97 : vector<1x128x128xbf16> to vector<128x128xbf16>
    %99 = arith.truncf %96 : vector<8x128xf32> to vector<8x128xbf16>
    %cst_56 = arith.constant dense<0.000000e+00> : vector<8x128xf32>
    %100 = tpu.matmul %99, %98, %cst_56 {dimension_numbers = #tpu.dot_dimension_numbers<[1], [0], [0], [1], [0, 0, 1, 1], [], []>} : vector<8x128xbf16>, vector<128x128xbf16>, vector<8x128xf32> -> vector<8x128xf32>
    %cst_57 = arith.constant 0.000000e+00 : f32
    %101 = vector.broadcast %cst_57 : f32 to vector<8x128xf32>
    %102 = arith.cmpf ogt, %100, %101 : vector<8x128xf32>
    %103 = math.exp %100 : vector<8x128xf32>
    %cst_58 = arith.constant 1.000000e+00 : f32
    %104 = vector.broadcast %cst_58 : f32 to vector<8x128xf32>
    %105 = arith.subf %103, %104 : vector<8x128xf32>
    %106 = arith.select %102, %100, %105 : vector<8x128xi1>, vector<8x128xf32>
    %c3_59 = arith.constant 3 : index
    %c0_60 = arith.constant 0 : index
    %c0_61 = arith.constant 0 : index
    %107 = vector.load %arg4[%c3_59, %c0_60, %c0_61] : memref<5x128x128xbf16, #tpu.memory_space<vmem>>, vector<1x128x128xbf16>
    %108 = vector.shape_cast %107 : vector<1x128x128xbf16> to vector<128x128xbf16>
    %109 = arith.truncf %106 : vector<8x128xf32> to vector<8x128xbf16>
    %cst_62 = arith.constant dense<0.000000e+00> : vector<8x128xf32>
    %110 = tpu.matmul %109, %108, %cst_62 {dimension_numbers = #tpu.dot_dimension_numbers<[1], [0], [0], [1], [0, 0, 1, 1], [], []>} : vector<8x128xbf16>, vector<128x128xbf16>, vector<8x128xf32> -> vector<8x128xf32>
    %cst_63 = arith.constant 0.000000e+00 : f32
    %111 = vector.broadcast %cst_63 : f32 to vector<8x128xf32>
    %112 = arith.cmpf ogt, %110, %111 : vector<8x128xf32>
    %113 = math.exp %110 : vector<8x128xf32>
    %cst_64 = arith.constant 1.000000e+00 : f32
    %114 = vector.broadcast %cst_64 : f32 to vector<8x128xf32>
    %115 = arith.subf %113, %114 : vector<8x128xf32>
    %116 = arith.select %112, %110, %115 : vector<8x128xi1>, vector<8x128xf32>
    %c4_65 = arith.constant 4 : index
    %c0_66 = arith.constant 0 : index
    %c0_67 = arith.constant 0 : index
    %117 = vector.load %arg4[%c4_65, %c0_66, %c0_67] : memref<5x128x128xbf16, #tpu.memory_space<vmem>>, vector<1x128x128xbf16>
    %118 = vector.shape_cast %117 : vector<1x128x128xbf16> to vector<128x128xbf16>
    %119 = arith.truncf %116 : vector<8x128xf32> to vector<8x128xbf16>
    %cst_68 = arith.constant dense<0.000000e+00> : vector<8x128xf32>
    %120 = tpu.matmul %119, %118, %cst_68 {dimension_numbers = #tpu.dot_dimension_numbers<[1], [0], [0], [1], [0, 0, 1, 1], [], []>} : vector<8x128xbf16>, vector<128x128xbf16>, vector<8x128xf32> -> vector<8x128xf32>
    %121 = arith.addf %116, %120 : vector<8x128xf32>
    %c8_69 = arith.constant 8 : index
    %c0_70 = arith.constant 0 : index
    %122 = vector.load %arg5[%c8_69, %c0_70] : memref<16x128xf32, #tpu.memory_space<vmem>>, vector<8x128xf32>
    tpu.vector_store %arg5[%c8_69, %c0_70], %121 {strides = array<i32>} : memref<16x128xf32, #tpu.memory_space<vmem>>, vector<8x128xf32>,
    return
  }
  func.func @transform_0(%arg0: i32) -> (i32, i32) {
    %c0_i32 = arith.constant 0 : i32
    %c0_i32_0 = arith.constant 0 : i32
    return %arg0, %c0_i32 : i32, i32
  }
  func.func @transform_1(%arg0: i32) -> (i32, i32) {
    %c0_i32 = arith.constant 0 : i32
    %c0_i32_0 = arith.constant 0 : i32
    %c0_i32_1 = arith.constant 0 : i32
    return %c0_i32, %c0_i32_0 : i32, i32
  }
  func.func @transform_2(%arg0: i32) -> (i32, i32, i32) {
    %c0_i32 = arith.constant 0 : i32
    %c0_i32_0 = arith.constant 0 : i32
    %c0_i32_1 = arith.constant 0 : i32
    %c0_i32_2 = arith.constant 0 : i32
    return %c0_i32, %c0_i32_0, %c0_i32_1 : i32, i32, i32
  }
  func.func @transform_3(%arg0: i32) -> (i32, i32, i32) {
    %c0_i32 = arith.constant 0 : i32
    %c0_i32_0 = arith.constant 0 : i32
    %c0_i32_1 = arith.constant 0 : i32
    %c0_i32_2 = arith.constant 0 : i32
    return %c0_i32, %c0_i32_0, %c0_i32_1 : i32, i32, i32
  }
  func.func @transform_4(%arg0: i32) -> (i32, i32) {
    %c0_i32 = arith.constant 0 : i32
    %c0_i32_0 = arith.constant 0 : i32
    return %arg0, %c0_i32 : i32, i32
  }
}

</mosaic_0001>

<llo_original>
// kernel: tpu_custom_call.1
$region0: #{tpu_custom_call.1}
  #allocation0 [shape = 'u32[]', space=smem, size = 0x4, offset = 0x4, fixed_abs, tag = 'smem constant byte address 0x4 - core index']
  #allocation1 [shape = 'u32[144,128]{1,0:T(1,128)}', space=vmem, size = 0x12000, scoped, tag = 'internal scratch']
  %s0 = inlined_call_operand.hbm [shape: f32[16,80], index: 0, kind: input, shape index: {}]
  %s1 = inlined_call_operand.hbm [shape: bf16[80,128], index: 1, kind: input, shape index: {}]
  %s2 = inlined_call_operand.vmem [shape: f32[2,1,128], index: 2, kind: input, shape index: {}]
  %s3 = inlined_call_operand.hbm [shape: bf16[5,128,128], index: 3, kind: input, shape index: {}]
  %s4 = inlined_call_operand.hbm [shape: f32[16,128], index: 4, kind: output, shape index: {}]
  %s5 = sld [smem:[#allocation0]]
  $region38: #{tpu_custom_call.1} parent=0
    _
  %s7 = ssub.s32 1, %s5
  %s8 = scalar_select 0, %s7, %s5
  $region1: #{tpu_custom_call.1} parent=0
    #allocation2 [shape = 'u8[8192]{0}', space=vmem, size = 0x2000, scoped, tag = 'input window, operand 0, single buffered']
    #allocation3 [shape = 's32[1]{0}', space=sflag, size = 0x4, scoped, tag = 'scoped memory for tpu_custom_call.1']
    #allocation4 [shape = 's32[1]{0}', space=sflag, size = 0x4, scoped, tag = 'scoped memory for tpu_custom_call.1']
    #allocation5 [shape = 'u8[20480]{0}', space=vmem, size = 0x5000, scoped, tag = 'input window, operand 1, single buffered']
    #allocation6 [shape = 's32[1]{0}', space=sflag, size = 0x4, scoped, tag = 'scoped memory for tpu_custom_call.1']
    #allocation7 [shape = 'u8[163840]{0}', space=vmem, size = 0x28000, scoped, tag = 'input window, operand 3, single buffered']
    #allocation8 [shape = 'u8[8192]{0}', space=vmem, size = 0x2000, scoped, tag = 'output window, operand 0, single buffered']
    %9 = vsyncpa [#allocation3], 0
    %10 = vsyncpa [#allocation6], 0
    %11 = vsyncpa [#allocation4], 0
    // Predicated region
    $region2: #{tpu_custom_call.1} parent=1 // pred_check
      _
    $region3: #{tpu_custom_call.1} parent=1 // pred_check_branch
      %13 = sbr.rel (0) target = $region5
    $region4: #{tpu_custom_call.1} parent=1 // pred_region
      %s15 = ssub.s32 256, 256
      %16 = vsyncadd [#allocation3], %s15
      %s17 = sshll.u32 [#allocation2], 4
      %s18 = int_to_ptr.vmem [resolvable:$true] %s17
      %23 = dma.hbm_to_vmem [thread:$0]  %s0, 256, %s18, [#allocation3], 128, 128, 8
    $region5: #{tpu_custom_call.1} parent=1 // pred_fallthru
      _
    // Predicated region
    $region6: #{tpu_custom_call.1} parent=1 // pred_check
      _
    $region7: #{tpu_custom_call.1} parent=1 // pred_check_branch
      %25 = sbr.rel (0) target = $region9
    $region8: #{tpu_custom_call.1} parent=1 // pred_region
      %s27 = ssub.s32 640, 640
      %28 = vsyncadd [#allocation6], %s27
      %s29 = sshll.u32 [#allocation5], 4
      %s30 = int_to_ptr.vmem [resolvable:$true] %s29
      %35 = dma.hbm_to_vmem [thread:$0]  %s1, 640, %s30, [#allocation6], 64, 64, 4
    $region9: #{tpu_custom_call.1} parent=1 // pred_fallthru
      _
    // Predicated region
    $region10: #{tpu_custom_call.1} parent=1 // pred_check
      _
    $region11: #{tpu_custom_call.1} parent=1 // pred_check_branch
      %37 = sbr.rel (0) target = $region13
    $region12: #{tpu_custom_call.1} parent=1 // pred_region
      _
    $region13: #{tpu_custom_call.1} parent=1 // pred_fallthru
      _
    // Predicated region
    $region14: #{tpu_custom_call.1} parent=1 // pred_check
      _
    $region15: #{tpu_custom_call.1} parent=1 // pred_check_branch
      %39 = sbr.rel (0) target = $region17
    $region16: #{tpu_custom_call.1} parent=1 // pred_region
      %s41 = ssub.s32 5120, 5120
      %42 = vsyncadd [#allocation6], %s41
      %s43 = sshll.u32 [#allocation7], 4
      %s44 = int_to_ptr.vmem [resolvable:$true] %s43
      %49 = dma.hbm_to_vmem [thread:$0]  %s3, 5120, %s44, [#allocation6], 64, 64, 4
    $region17: #{tpu_custom_call.1} parent=1 // pred_fallthru
      _
    // Predicated region
    $region18: #{tpu_custom_call.1} parent=1 // pred_check
      _
    $region19: #{tpu_custom_call.1} parent=1 // pred_check_branch
      %51 = sbr.rel (0) target = $region21
    $region20: #{tpu_custom_call.1} parent=1 // pred_region
      %52 = dma.done [#allocation3], 256
    $region21: #{tpu_custom_call.1} parent=1 // pred_fallthru
      _
    // Predicated region
    $region22: #{tpu_custom_call.1} parent=1 // pred_check
      _
    $region23: #{tpu_custom_call.1} parent=1 // pred_check_branch
      %54 = sbr.rel (0) target = $region25
    $region24: #{tpu_custom_call.1} parent=1 // pred_region
      %55 = dma.done [#allocation6], 640
    $region25: #{tpu_custom_call.1} parent=1 // pred_fallthru
      _
    // Predicated region
    $region26: #{tpu_custom_call.1} parent=1 // pred_check
      _
    $region27: #{tpu_custom_call.1} parent=1 // pred_check_branch
      %57 = sbr.rel (0) target = $region29
    $region28: #{tpu_custom_call.1} parent=1 // pred_region
      %58 = dma.done [#allocation6], 5120
    $region29: #{tpu_custom_call.1} parent=1 // pred_fallthru
      _
    %v60 = vld [vmem:[#allocation5] sm:$0xf]
    %v61 = vld [vmem:[#allocation5 + $0x4] sm:$0xf]
    %v62 = vld [vmem:[#allocation5 + $0x8] sm:$0xf]
    %v63 = vld [vmem:[#allocation5 + $0xc] sm:$0xf]
    %v64 = vld [vmem:[#allocation5 + $0x10] sm:$0xf]
    %v65 = vld [vmem:[#allocation5 + $0x14] sm:$0xf]
    %v66 = vld [vmem:[#allocation5 + $0x18] sm:$0xf]
    %v67 = vld [vmem:[#allocation5 + $0x1c] sm:$0xf]
    %v68 = vld [vmem:[#allocation5 + $0x20] sm:$0xf]
    %v69 = vld [vmem:[#allocation5 + $0x24] sm:$0xf]
    %v70 = vld [vmem:[%s2] sm:$0x1]
    %s71 = scalar_lea.vmem %s2, 1
    %v72 = vld [vmem:[%s71] sm:$0x1]
    %v73 = vld [vmem:[#allocation2] sm:$0xff]
    %v74 = vpack.c.bf16 %v73, %v73
    %v76 = vlaneseq
    %v77 = vshrl.u32 %v76, 7
    %v78 = vsub.s32 0, %v77
    %v79 = vrot.slane %v70, %v78
    %v91 = vunpack.c.l.b16 %v60
    %v92 = vunpack.c.l.b16 %v61
    %v93 = vunpack.c.l.b16 %v62
    %v94 = vunpack.c.l.b16 %v63
    %v95 = vunpack.c.l.b16 %v64
    %v96 = vunpack.c.l.b16 %v65
    %v97 = vunpack.c.l.b16 %v66
    %v98 = vunpack.c.l.b16 %v67
    %v99 = vunpack.c.l.b16 %v68
    %v100 = vunpack.c.l.b16 %v69
    %v101 = vpack.c.b16 %v92, %v91
    %v102 = vpack.c.b16 %v94, %v93
    %v103 = vpack.c.b16 %v96, %v95
    %v104 = vpack.c.b16 %v98, %v97
    %v105 = vpack.c.b16 %v100, %v99
    %vm111 = vcmask 654336
    %v113 = vsel %vm111, %v74, 0
    %115 = vmatprep.subr.bf16.mxu0 0
    %116 = vmatpush1.bf16.msra.mxu0 %v101
    %117 = vmatprep.subr.bf16.mxu0 0
    %118 = vmatpush1.bf16.msra.mxu0 %v102
    %119 = vmatprep.subr.bf16.mxu0 0
    %120 = vmatpush1.bf16.msra.mxu0 %v103
    %121 = vmatprep.subr.bf16.mxu0 0
    %122 = vmatpush1.bf16.msra.mxu0 %v104
    %123 = vmatprep.subr.bf16.mxu0 0
    %124 = vmatpush1.bf16.msra.mxu0 %v105
    %125 = vmatprep.subr.bf16.mxu0 0
    %126 = vmatpush1.bf16.msra.mxu0 0
    %127 = vmatprep.subr.bf16.mxu0 0
    %128 = vmatpush1.bf16.msra.mxu0 0
    %129 = vmatprep.subr.bf16.mxu0 0
    %130 = vmatpush1.bf16.msra.mxu0 0
    %131 = vmatprep.subr.bf16.mxu0 0
    %132 = vmatpush1.bf16.msra.mxu0 0
    %133 = vmatprep.subr.bf16.mxu0 0
    %134 = vmatpush1.bf16.msra.mxu0 0
    %135 = vmatprep.subr.bf16.mxu0 0
    %136 = vmatpush1.bf16.msra.mxu0 0
    %137 = vmatprep.subr.bf16.mxu0 0
    %138 = vmatpush1.bf16.msra.mxu0 0
    %139 = vmatprep.subr.bf16.mxu0 0
    %140 = vmatpush1.bf16.msra.mxu0 0
    %141 = vmatprep.subr.bf16.mxu0 0
    %142 = vmatpush1.bf16.msra.mxu0 0
    %143 = vmatprep.subr.bf16.mxu0 0
    %144 = vmatpush1.bf16.msra.mxu0 0
    %145 = vmatprep.subr.bf16.mxu0 0
    %146 = vmatpush1.bf16.msra.mxu0 0
    %147 = vmatprep.mubr.bf16.mxu0 0
    %148 = vmatmul.mubr.bf16.gmra.mrb[0].mxu0 %v113
    %v149 = vpop.f32.mrb[0].mxu0
    %v150 = vadd.f32 %v79, %v149
    %v151 = vpop.f32.mrb[0].mxu0
    %v152 = vpop.f32.mrb[0].mxu0
    %v153 = vpop.f32.mrb[0].mxu0
    %154 = vdwg.mxu0
    %vm155 = vcmp.gt.f32.partialorder %v150, 0.0
    %v156 = vmul.f32 %v150, 1.442695
    %v157 = vpow.pop %v156
    %v158 = vsub.f32 %v157, 1.0
    %v159 = vsel %vm155, %v150, %v158
    %v160 = vld [vmem:[#allocation7] sm:$0xf]
    %v161 = vld [vmem:[#allocation7 + $0x4] sm:$0xf]
    %v162 = vld [vmem:[#allocation7 + $0x8] sm:$0xf]
    %v163 = vld [vmem:[#allocation7 + $0xc] sm:$0xf]
    %v164 = vld [vmem:[#allocation7 + $0x10] sm:$0xf]
    %v165 = vld [vmem:[#allocation7 + $0x14] sm:$0xf]
    %v166 = vld [vmem:[#allocation7 + $0x18] sm:$0xf]
    %v167 = vld [vmem:[#allocation7 + $0x1c] sm:$0xf]
    %v168 = vld [vmem:[#allocation7 + $0x20] sm:$0xf]
    %v169 = vld [vmem:[#allocation7 + $0x24] sm:$0xf]
    %v170 = vld [vmem:[#allocation7 + $0x28] sm:$0xf]
    %v171 = vld [vmem:[#allocation7 + $0x2c] sm:$0xf]
    %v172 = vld [vmem:[#allocation7 + $0x30] sm:$0xf]
    %v173 = vld [vmem:[#allocation7 + $0x34] sm:$0xf]
    %v174 = vld [vmem:[#allocation7 + $0x38] sm:$0xf]
    %v175 = vld [vmem:[#allocation7 + $0x3c] sm:$0xf]
    %v176 = vpack.c.bf16 %v159, %v159
    %v193 = vunpack.c.l.b16 %v160
    %v194 = vunpack.c.l.b16 %v161
    %v195 = vunpack.c.l.b16 %v162
    %v196 = vunpack.c.l.b16 %v163
    %v197 = vunpack.c.l.b16 %v164
    %v198 = vunpack.c.l.b16 %v165
    %v199 = vunpack.c.l.b16 %v166
    %v200 = vunpack.c.l.b16 %v167
    %v201 = vunpack.c.l.b16 %v168
    %v202 = vunpack.c.l.b16 %v169
    %v203 = vunpack.c.l.b16 %v170
    %v204 = vunpack.c.l.b16 %v171
    %v205 = vunpack.c.l.b16 %v172
    %v206 = vunpack.c.l.b16 %v173
    %v207 = vunpack.c.l.b16 %v174
    %v208 = vunpack.c.l.b16 %v175
    %v209 = vpack.c.b16 %v194, %v193
    %v210 = vpack.c.b16 %v196, %v195
    %v211 = vpack.c.b16 %v198, %v197
    %v212 = vpack.c.b16 %v200, %v199
    %v213 = vpack.c.b16 %v202, %v201
    %v214 = vpack.c.b16 %v204, %v203
    %v215 = vpack.c.b16 %v206, %v205
    %v216 = vpack.c.b16 %v208, %v207
    %225 = vmatprep.subr.bf16.mxu0 0
    %226 = vmatpush1.bf16.msra.mxu0 %v209
    %227 = vmatprep.subr.bf16.mxu0 0
    %228 = vmatpush1.bf16.msra.mxu0 %v210
    %229 = vmatprep.subr.bf16.mxu0 0
    %230 = vmatpush1.bf16.msra.mxu0 %v211
    %231 = vmatprep.subr.bf16.mxu0 0
    %232 = vmatpush1.bf16.msra.mxu0 %v212
    %233 = vmatprep.subr.bf16.mxu0 0
    %234 = vmatpush1.bf16.msra.mxu0 %v213
    %235 = vmatprep.subr.bf16.mxu0 0
    %236 = vmatpush1.bf16.msra.mxu0 %v214
    %237 = vmatprep.subr.bf16.mxu0 0
    %238 = vmatpush1.bf16.msra.mxu0 %v215
    %239 = vmatprep.subr.bf16.mxu0 0
    %240 = vmatpush1.bf16.msra.mxu0 %v216
    %241 = vmatprep.subr.bf16.mxu0 0
    %242 = vmatpush1.bf16.msra.mxu0 0
    %243 = vmatprep.subr.bf16.mxu0 0
    %244 = vmatpush1.bf16.msra.mxu0 0
    %245 = vmatprep.subr.bf16.mxu0 0
    %246 = vmatpush1.bf16.msra.mxu0 0
    %247 = vmatprep.subr.bf16.mxu0 0
    %248 = vmatpush1.bf16.msra.mxu0 0
    %249 = vmatprep.subr.bf16.mxu0 0
    %250 = vmatpush1.bf16.msra.mxu0 0
    %251 = vmatprep.subr.bf16.mxu0 0
    %252 = vmatpush1.bf16.msra.mxu0 0
    %253 = vmatprep.subr.bf16.mxu0 0
    %254 = vmatpush1.bf16.msra.mxu0 0
    %255 = vmatprep.subr.bf16.mxu0 0
    %256 = vmatpush1.bf16.msra.mxu0 0
    %257 = vmatprep.mubr.bf16.mxu0 0
    %258 = vmatmul.mubr.bf16.gmra.mrb[0].mxu0 %v176
    %v259 = vpop.f32.mrb[0].mxu0
    %v260 = vadd.f32 0.0, %v259
    %v261 = vpop.f32.mrb[0].mxu0
    %v262 = vpop.f32.mrb[0].mxu0
    %v263 = vpop.f32.mrb[0].mxu0
    %264 = vdwg.mxu0
    %vm265 = vcmp.gt.f32.partialorder %v260, 0.0
    %v266 = vmul.f32 %v260, 1.442695
    %v267 = vpow.pop %v266
    %v268 = vsub.f32 %v267, 1.0
    %v269 = vsel %vm265, %v260, %v268
    %s270 = scalar_lea.vmem [#allocation7], 64
    %v271 = vld [vmem:[%s270] sm:$0xf]
    %v272 = vld [vmem:[%s270 + $0x4] sm:$0xf]
    %v273 = vld [vmem:[%s270 + $0x8] sm:$0xf]
    %v274 = vld [vmem:[%s270 + $0xc] sm:$0xf]
    %v275 = vld [vmem:[%s270 + $0x10] sm:$0xf]
    %v276 = vld [vmem:[%s270 + $0x14] sm:$0xf]
    %v277 = vld [vmem:[%s270 + $0x18] sm:$0xf]
    %v278 = vld [vmem:[%s270 + $0x1c] sm:$0xf]
    %v279 = vld [vmem:[%s270 + $0x20] sm:$0xf]
    %v280 = vld [vmem:[%s270 + $0x24] sm:$0xf]
    %v281 = vld [vmem:[%s270 + $0x28] sm:$0xf]
    %v282 = vld [vmem:[%s270 + $0x2c] sm:$0xf]
    %v283 = vld [vmem:[%s270 + $0x30] sm:$0xf]
    %v284 = vld [vmem:[%s270 + $0x34] sm:$0xf]
    %v285 = vld [vmem:[%s270 + $0x38] sm:$0xf]
    %v286 = vld [vmem:[%s270 + $0x3c] sm:$0xf]
    %v287 = vpack.c.bf16 %v269, %v269
    %v289 = vlaneseq
    %v290 = vshrl.u32 %v289, 7
    %v291 = vsub.s32 0, %v290
    %v292 = vrot.slane %v72, %v291
    %v310 = vunpack.c.l.b16 %v271
    %v311 = vunpack.c.l.b16 %v272
    %v312 = vunpack.c.l.b16 %v273
    %v313 = vunpack.c.l.b16 %v274
    %v314 = vunpack.c.l.b16 %v275
    %v315 = vunpack.c.l.b16 %v276
    %v316 = vunpack.c.l.b16 %v277
    %v317 = vunpack.c.l.b16 %v278
    %v318 = vunpack.c.l.b16 %v279
    %v319 = vunpack.c.l.b16 %v280
    %v320 = vunpack.c.l.b16 %v281
    %v321 = vunpack.c.l.b16 %v282
    %v322 = vunpack.c.l.b16 %v283
    %v323 = vunpack.c.l.b16 %v284
    %v324 = vunpack.c.l.b16 %v285
    %v325 = vunpack.c.l.b16 %v286
    %v326 = vpack.c.b16 %v311, %v310
    %v327 = vpack.c.b16 %v313, %v312
    %v328 = vpack.c.b16 %v315, %v314
    %v329 = vpack.c.b16 %v317, %v316
    %v330 = vpack.c.b16 %v319, %v318
    %v331 = vpack.c.b16 %v321, %v320
    %v332 = vpack.c.b16 %v323, %v322
    %v333 = vpack.c.b16 %v325, %v324
    %342 = vmatprep.subr.bf16.mxu0 0
    %343 = vmatpush1.bf16.msra.mxu0 %v326
    %344 = vmatprep.subr.bf16.mxu0 0
    %345 = vmatpush1.bf16.msra.mxu0 %v327
    %346 = vmatprep.subr.bf16.mxu0 0
    %347 = vmatpush1.bf16.msra.mxu0 %v328
    %348 = vmatprep.subr.bf16.mxu0 0
    %349 = vmatpush1.bf16.msra.mxu0 %v329
    %350 = vmatprep.subr.bf16.mxu0 0
    %351 = vmatpush1.bf16.msra.mxu0 %v330
    %352 = vmatprep.subr.bf16.mxu0 0
    %353 = vmatpush1.bf16.msra.mxu0 %v331
    %354 = vmatprep.subr.bf16.mxu0 0
    %355 = vmatpush1.bf16.msra.mxu0 %v332
    %356 = vmatprep.subr.bf16.mxu0 0
    %357 = vmatpush1.bf16.msra.mxu0 %v333
    %358 = vmatprep.subr.bf16.mxu0 0
    %359 = vmatpush1.bf16.msra.mxu0 0
    %360 = vmatprep.subr.bf16.mxu0 0
    %361 = vmatpush1.bf16.msra.mxu0 0
    %362 = vmatprep.subr.bf16.mxu0 0
    %363 = vmatpush1.bf16.msra.mxu0 0
    %364 = vmatprep.subr.bf16.mxu0 0
    %365 = vmatpush1.bf16.msra.mxu0 0
    %366 = vmatprep.subr.bf16.mxu0 0
    %367 = vmatpush1.bf16.msra.mxu0 0
    %368 = vmatprep.subr.bf16.mxu0 0
    %369 = vmatpush1.bf16.msra.mxu0 0
    %370 = vmatprep.subr.bf16.mxu0 0
    %371 = vmatpush1.bf16.msra.mxu0 0
    %372 = vmatprep.subr.bf16.mxu0 0
    %373 = vmatpush1.bf16.msra.mxu0 0
    %374 = vmatprep.mubr.bf16.mxu0 0
    %375 = vmatmul.mubr.bf16.gmra.mrb[0].mxu0 %v287
    %v376 = vpop.f32.mrb[0].mxu0
    %v377 = vadd.f32 %v292, %v376
    %v378 = vpop.f32.mrb[0].mxu0
    %v379 = vpop.f32.mrb[0].mxu0
    %v380 = vpop.f32.mrb[0].mxu0
    %381 = vdwg.mxu0
    %vm382 = vcmp.gt.f32.partialorder %v377, 0.0
    %v383 = vmul.f32 %v377, 1.442695
    %v384 = vpow.pop %v383
    %v385 = vsub.f32 %v384, 1.0
    %v386 = vsel %vm382, %v377, %v385
    %s387 = scalar_lea.vmem [#allocation7], 128
    %v388 = vld [vmem:[%s387] sm:$0xf]
    %v389 = vld [vmem:[%s387 + $0x4] sm:$0xf]
    %v390 = vld [vmem:[%s387 + $0x8] sm:$0xf]
    %v391 = vld [vmem:[%s387 + $0xc] sm:$0xf]
    %v392 = vld [vmem:[%s387 + $0x10] sm:$0xf]
    %v393 = vld [vmem:[%s387 + $0x14] sm:$0xf]
    %v394 = vld [vmem:[%s387 + $0x18] sm:$0xf]
    %v395 = vld [vmem:[%s387 + $0x1c] sm:$0xf]
    %v396 = vld [vmem:[%s387 + $0x20] sm:$0xf]
    %v397 = vld [vmem:[%s387 + $0x24] sm:$0xf]
    %v398 = vld [vmem:[%s387 + $0x28] sm:$0xf]
    %v399 = vld [vmem:[%s387 + $0x2c] sm:$0xf]
    %v400 = vld [vmem:[%s387 + $0x30] sm:$0xf]
    %v401 = vld [vmem:[%s387 + $0x34] sm:$0xf]
    %v402 = vld [vmem:[%s387 + $0x38] sm:$0xf]
    %v403 = vld [vmem:[%s387 + $0x3c] sm:$0xf]
    %v404 = vpack.c.bf16 %v386, %v386
    %v421 = vunpack.c.l.b16 %v388
    %v422 = vunpack.c.l.b16 %v389
    %v423 = vunpack.c.l.b16 %v390
    %v424 = vunpack.c.l.b16 %v391
    %v425 = vunpack.c.l.b16 %v392
    %v426 = vunpack.c.l.b16 %v393
    %v427 = vunpack.c.l.b16 %v394
    %v428 = vunpack.c.l.b16 %v395
    %v429 = vunpack.c.l.b16 %v396
    %v430 = vunpack.c.l.b16 %v397
    %v431 = vunpack.c.l.b16 %v398
    %v432 = vunpack.c.l.b16 %v399
    %v433 = vunpack.c.l.b16 %v400
    %v434 = vunpack.c.l.b16 %v401
    %v435 = vunpack.c.l.b16 %v402
    %v436 = vunpack.c.l.b16 %v403
    %v437 = vpack.c.b16 %v422, %v421
    %v438 = vpack.c.b16 %v424, %v423
    %v439 = vpack.c.b16 %v426, %v425
    %v440 = vpack.c.b16 %v428, %v427
    %v441 = vpack.c.b16 %v430, %v429
    %v442 = vpack.c.b16 %v432, %v431
    %v443 = vpack.c.b16 %v434, %v433
    %v444 = vpack.c.b16 %v436, %v435
    %453 = vmatprep.subr.bf16.mxu0 0
    %454 = vmatpush1.bf16.msra.mxu0 %v437
    %455 = vmatprep.subr.bf16.mxu0 0
    %456 = vmatpush1.bf16.msra.mxu0 %v438
    %457 = vmatprep.subr.bf16.mxu0 0
    %458 = vmatpush1.bf16.msra.mxu0 %v439
    %459 = vmatprep.subr.bf16.mxu0 0
    %460 = vmatpush1.bf16.msra.mxu0 %v440
    %461 = vmatprep.subr.bf16.mxu0 0
    %462 = vmatpush1.bf16.msra.mxu0 %v441
    %463 = vmatprep.subr.bf16.mxu0 0
    %464 = vmatpush1.bf16.msra.mxu0 %v442
    %465 = vmatprep.subr.bf16.mxu0 0
    %466 = vmatpush1.bf16.msra.mxu0 %v443
    %467 = vmatprep.subr.bf16.mxu0 0
    %468 = vmatpush1.bf16.msra.mxu0 %v444
    %469 = vmatprep.subr.bf16.mxu0 0
    %470 = vmatpush1.bf16.msra.mxu0 0
    %471 = vmatprep.subr.bf16.mxu0 0
    %472 = vmatpush1.bf16.msra.mxu0 0
    %473 = vmatprep.subr.bf16.mxu0 0
    %474 = vmatpush1.bf16.msra.mxu0 0
    %475 = vmatprep.subr.bf16.mxu0 0
    %476 = vmatpush1.bf16.msra.mxu0 0
    %477 = vmatprep.subr.bf16.mxu0 0
    %478 = vmatpush1.bf16.msra.mxu0 0
    %479 = vmatprep.subr.bf16.mxu0 0
    %480 = vmatpush1.bf16.msra.mxu0 0
    %481 = vmatprep.subr.bf16.mxu0 0
    %482 = vmatpush1.bf16.msra.mxu0 0
    %483 = vmatprep.subr.bf16.mxu0 0
    %484 = vmatpush1.bf16.msra.mxu0 0
    %485 = vmatprep.mubr.bf16.mxu0 0
    %486 = vmatmul.mubr.bf16.gmra.mrb[0].mxu0 %v404
    %v487 = vpop.f32.mrb[0].mxu0
    %v488 = vadd.f32 0.0, %v487
    %v489 = vpop.f32.mrb[0].mxu0
    %v490 = vpop.f32.mrb[0].mxu0
    %v491 = vpop.f32.mrb[0].mxu0
    %492 = vdwg.mxu0
    %vm493 = vcmp.gt.f32.partialorder %v488, 0.0
    %v494 = vmul.f32 %v488, 1.442695
    %v495 = vpow.pop %v494
    %v496 = vsub.f32 %v495, 1.0
    %v497 = vsel %vm493, %v488, %v496
    %s498 = scalar_lea.vmem [#allocation7], 192
    %v499 = vld [vmem:[%s498] sm:$0xf]
    %v500 = vld [vmem:[%s498 + $0x4] sm:$0xf]
    %v501 = vld [vmem:[%s498 + $0x8] sm:$0xf]
    %v502 = vld [vmem:[%s498 + $0xc] sm:$0xf]
    %v503 = vld [vmem:[%s498 + $0x10] sm:$0xf]
    %v504 = vld [vmem:[%s498 + $0x14] sm:$0xf]
    %v505 = vld [vmem:[%s498 + $0x18] sm:$0xf]
    %v506 = vld [vmem:[%s498 + $0x1c] sm:$0xf]
    %v507 = vld [vmem:[%s498 + $0x20] sm:$0xf]
    %v508 = vld [vmem:[%s498 + $0x24] sm:$0xf]
    %v509 = vld [vmem:[%s498 + $0x28] sm:$0xf]
    %v510 = vld [vmem:[%s498 + $0x2c] sm:$0xf]
    %v511 = vld [vmem:[%s498 + $0x30] sm:$0xf]
    %v512 = vld [vmem:[%s498 + $0x34] sm:$0xf]
    %v513 = vld [vmem:[%s498 + $0x38] sm:$0xf]
    %v514 = vld [vmem:[%s498 + $0x3c] sm:$0xf]
    %v515 = vpack.c.bf16 %v497, %v497
    %v532 = vunpack.c.l.b16 %v499
    %v533 = vunpack.c.l.b16 %v500
    %v534 = vunpack.c.l.b16 %v501
    %v535 = vunpack.c.l.b16 %v502
    %v536 = vunpack.c.l.b16 %v503
    %v537 = vunpack.c.l.b16 %v504
    %v538 = vunpack.c.l.b16 %v505
    %v539 = vunpack.c.l.b16 %v506
    %v540 = vunpack.c.l.b16 %v507
    %v541 = vunpack.c.l.b16 %v508
    %v542 = vunpack.c.l.b16 %v509
    %v543 = vunpack.c.l.b16 %v510
    %v544 = vunpack.c.l.b16 %v511
    %v545 = vunpack.c.l.b16 %v512
    %v546 = vunpack.c.l.b16 %v513
    %v547 = vunpack.c.l.b16 %v514
    %v548 = vpack.c.b16 %v533, %v532
    %v549 = vpack.c.b16 %v535, %v534
    %v550 = vpack.c.b16 %v537, %v536
    %v551 = vpack.c.b16 %v539, %v538
    %v552 = vpack.c.b16 %v541, %v540
    %v553 = vpack.c.b16 %v543, %v542
    %v554 = vpack.c.b16 %v545, %v544
    %v555 = vpack.c.b16 %v547, %v546
    %564 = vmatprep.subr.bf16.mxu0 0
    %565 = vmatpush1.bf16.msra.mxu0 %v548
    %566 = vmatprep.subr.bf16.mxu0 0
    %567 = vmatpush1.bf16.msra.mxu0 %v549
    %568 = vmatprep.subr.bf16.mxu0 0
    %569 = vmatpush1.bf16.msra.mxu0 %v550
    %570 = vmatprep.subr.bf16.mxu0 0
    %571 = vmatpush1.bf16.msra.mxu0 %v551
    %572 = vmatprep.subr.bf16.mxu0 0
    %573 = vmatpush1.bf16.msra.mxu0 %v552
    %574 = vmatprep.subr.bf16.mxu0 0
    %575 = vmatpush1.bf16.msra.mxu0 %v553
    %576 = vmatprep.subr.bf16.mxu0 0
    %577 = vmatpush1.bf16.msra.mxu0 %v554
    %578 = vmatprep.subr.bf16.mxu0 0
    %579 = vmatpush1.bf16.msra.mxu0 %v555
    %580 = vmatprep.subr.bf16.mxu0 0
    %581 = vmatpush1.bf16.msra.mxu0 0
    %582 = vmatprep.subr.bf16.mxu0 0
    %583 = vmatpush1.bf16.msra.mxu0 0
    %584 = vmatprep.subr.bf16.mxu0 0
    %585 = vmatpush1.bf16.msra.mxu0 0
    %586 = vmatprep.subr.bf16.mxu0 0
    %587 = vmatpush1.bf16.msra.mxu0 0
    %588 = vmatprep.subr.bf16.mxu0 0
    %589 = vmatpush1.bf16.msra.mxu0 0
    %590 = vmatprep.subr.bf16.mxu0 0
    %591 = vmatpush1.bf16.msra.mxu0 0
    %592 = vmatprep.subr.bf16.mxu0 0
    %593 = vmatpush1.bf16.msra.mxu0 0
    %594 = vmatprep.subr.bf16.mxu0 0
    %595 = vmatpush1.bf16.msra.mxu0 0
    %596 = vmatprep.mubr.bf16.mxu0 0
    %597 = vmatmul.mubr.bf16.gmra.mrb[0].mxu0 %v515
    %v598 = vpop.f32.mrb[0].mxu0
    %v599 = vadd.f32 0.0, %v598
    %v600 = vpop.f32.mrb[0].mxu0
    %v601 = vpop.f32.mrb[0].mxu0
    %v602 = vpop.f32.mrb[0].mxu0
    %603 = vdwg.mxu0
    %vm604 = vcmp.gt.f32.partialorder %v599, 0.0
    %v605 = vmul.f32 %v599, 1.442695
    %v606 = vpow.pop %v605
    %v607 = vsub.f32 %v606, 1.0
    %v608 = vsel %vm604, %v599, %v607
    %s609 = scalar_lea.vmem [#allocation7], 256
    %v610 = vld [vmem:[%s609] sm:$0xf]
    %v611 = vld [vmem:[%s609 + $0x4] sm:$0xf]
    %v612 = vld [vmem:[%s609 + $0x8] sm:$0xf]
    %v613 = vld [vmem:[%s609 + $0xc] sm:$0xf]
    %v614 = vld [vmem:[%s609 + $0x10] sm:$0xf]
    %v615 = vld [vmem:[%s609 + $0x14] sm:$0xf]
    %v616 = vld [vmem:[%s609 + $0x18] sm:$0xf]
    %v617 = vld [vmem:[%s609 + $0x1c] sm:$0xf]
    %v618 = vld [vmem:[%s609 + $0x20] sm:$0xf]
    %v619 = vld [vmem:[%s609 + $0x24] sm:$0xf]
    %v620 = vld [vmem:[%s609 + $0x28] sm:$0xf]
    %v621 = vld [vmem:[%s609 + $0x2c] sm:$0xf]
    %v622 = vld [vmem:[%s609 + $0x30] sm:$0xf]
    %v623 = vld [vmem:[%s609 + $0x34] sm:$0xf]
    %v624 = vld [vmem:[%s609 + $0x38] sm:$0xf]
    %v625 = vld [vmem:[%s609 + $0x3c] sm:$0xf]
    %v626 = vpack.c.bf16 %v608, %v608
    %v643 = vunpack.c.l.b16 %v610
    %v644 = vunpack.c.l.b16 %v611
    %v645 = vunpack.c.l.b16 %v612
    %v646 = vunpack.c.l.b16 %v613
    %v647 = vunpack.c.l.b16 %v614
    %v648 = vunpack.c.l.b16 %v615
    %v649 = vunpack.c.l.b16 %v616
    %v650 = vunpack.c.l.b16 %v617
    %v651 = vunpack.c.l.b16 %v618
    %v652 = vunpack.c.l.b16 %v619
    %v653 = vunpack.c.l.b16 %v620
    %v654 = vunpack.c.l.b16 %v621
    %v655 = vunpack.c.l.b16 %v622
    %v656 = vunpack.c.l.b16 %v623
    %v657 = vunpack.c.l.b16 %v624
    %v658 = vunpack.c.l.b16 %v625
    %v659 = vpack.c.b16 %v644, %v643
    %v660 = vpack.c.b16 %v646, %v645
    %v661 = vpack.c.b16 %v648, %v647
    %v662 = vpack.c.b16 %v650, %v649
    %v663 = vpack.c.b16 %v652, %v651
    %v664 = vpack.c.b16 %v654, %v653
    %v665 = vpack.c.b16 %v656, %v655
    %v666 = vpack.c.b16 %v658, %v657
    %675 = vmatprep.subr.bf16.mxu0 0
    %676 = vmatpush1.bf16.msra.mxu0 %v659
    %677 = vmatprep.subr.bf16.mxu0 0
    %678 = vmatpush1.bf16.msra.mxu0 %v660
    %679 = vmatprep.subr.bf16.mxu0 0
    %680 = vmatpush1.bf16.msra.mxu0 %v661
    %681 = vmatprep.subr.bf16.mxu0 0
    %682 = vmatpush1.bf16.msra.mxu0 %v662
    %683 = vmatprep.subr.bf16.mxu0 0
    %684 = vmatpush1.bf16.msra.mxu0 %v663
    %685 = vmatprep.subr.bf16.mxu0 0
    %686 = vmatpush1.bf16.msra.mxu0 %v664
    %687 = vmatprep.subr.bf16.mxu0 0
    %688 = vmatpush1.bf16.msra.mxu0 %v665
    %689 = vmatprep.subr.bf16.mxu0 0
    %690 = vmatpush1.bf16.msra.mxu0 %v666
    %691 = vmatprep.subr.bf16.mxu0 0
    %692 = vmatpush1.bf16.msra.mxu0 0
    %693 = vmatprep.subr.bf16.mxu0 0
    %694 = vmatpush1.bf16.msra.mxu0 0
    %695 = vmatprep.subr.bf16.mxu0 0
    %696 = vmatpush1.bf16.msra.mxu0 0
    %697 = vmatprep.subr.bf16.mxu0 0
    %698 = vmatpush1.bf16.msra.mxu0 0
    %699 = vmatprep.subr.bf16.mxu0 0
    %700 = vmatpush1.bf16.msra.mxu0 0
    %701 = vmatprep.subr.bf16.mxu0 0
    %702 = vmatpush1.bf16.msra.mxu0 0
    %703 = vmatprep.subr.bf16.mxu0 0
    %704 = vmatpush1.bf16.msra.mxu0 0
    %705 = vmatprep.subr.bf16.mxu0 0
    %706 = vmatpush1.bf16.msra.mxu0 0
    %707 = vmatprep.mubr.bf16.mxu0 0
    %708 = vmatmul.mubr.bf16.gmra.mrb[0].mxu0 %v626
    %v709 = vpop.f32.mrb[0].mxu0
    %v710 = vadd.f32 0.0, %v709
    %v711 = vpop.f32.mrb[0].mxu0
    %v712 = vpop.f32.mrb[0].mxu0
    %v713 = vpop.f32.mrb[0].mxu0
    %714 = vdwg.mxu0
    %v715 = vadd.f32 %v608, %v710
    %716 = vst [vmem:[#allocation8] sm:$0xff] %v715
    %v717 = vld [vmem:[#allocation2 + $0x8] sm:$0xff]
    %v718 = vpack.c.bf16 %v717, %v717
    %v720 = vsel %vm111, %v718, 0
    %722 = vmatprep.subr.bf16.mxu0 0
    %723 = vmatpush1.bf16.msra.mxu0 %v101
    %724 = vmatprep.subr.bf16.mxu0 0
    %725 = vmatpush1.bf16.msra.mxu0 %v102
    %726 = vmatprep.subr.bf16.mxu0 0
    %727 = vmatpush1.bf16.msra.mxu0 %v103
    %728 = vmatprep.subr.bf16.mxu0 0
    %729 = vmatpush1.bf16.msra.mxu0 %v104
    %730 = vmatprep.subr.bf16.mxu0 0
    %731 = vmatpush1.bf16.msra.mxu0 %v105
    %732 = vmatprep.subr.bf16.mxu0 0
    %733 = vmatpush1.bf16.msra.mxu0 0
    %734 = vmatprep.subr.bf16.mxu0 0
    %735 = vmatpush1.bf16.msra.mxu0 0
    %736 = vmatprep.subr.bf16.mxu0 0
    %737 = vmatpush1.bf16.msra.mxu0 0
    %738 = vmatprep.subr.bf16.mxu0 0
    %739 = vmatpush1.bf16.msra.mxu0 0
    %740 = vmatprep.subr.bf16.mxu0 0
    %741 = vmatpush1.bf16.msra.mxu0 0
    %742 = vmatprep.subr.bf16.mxu0 0
    %743 = vmatpush1.bf16.msra.mxu0 0
    %744 = vmatprep.subr.bf16.mxu0 0
    %745 = vmatpush1.bf16.msra.mxu0 0
    %746 = vmatprep.subr.bf16.mxu0 0
    %747 = vmatpush1.bf16.msra.mxu0 0
    %748 = vmatprep.subr.bf16.mxu0 0
    %749 = vmatpush1.bf16.msra.mxu0 0
    %750 = vmatprep.subr.bf16.mxu0 0
    %751 = vmatpush1.bf16.msra.mxu0 0
    %752 = vmatprep.subr.bf16.mxu0 0
    %753 = vmatpush1.bf16.msra.mxu0 0
    %754 = vmatprep.mubr.bf16.mxu0 0
    %755 = vmatmul.mubr.bf16.gmra.mrb[0].mxu0 %v720
    %v756 = vpop.f32.mrb[0].mxu0
    %v757 = vadd.f32 %v79, %v756
    %v758 = vpop.f32.mrb[0].mxu0
    %v759 = vpop.f32.mrb[0].mxu0
    %v760 = vpop.f32.mrb[0].mxu0
    %761 = vdwg.mxu0
    %vm762 = vcmp.gt.f32.partialorder %v757, 0.0
    %v763 = vmul.f32 %v757, 1.442695
    %v764 = vpow.pop %v763
    %v765 = vsub.f32 %v764, 1.0
    %v766 = vsel %vm762, %v757, %v765
    %v767 = vld [vmem:[#allocation7] sm:$0xf]
    %v768 = vld [vmem:[#allocation7 + $0x4] sm:$0xf]
    %v769 = vld [vmem:[#allocation7 + $0x8] sm:$0xf]
    %v770 = vld [vmem:[#allocation7 + $0xc] sm:$0xf]
    %v771 = vld [vmem:[#allocation7 + $0x10] sm:$0xf]
    %v772 = vld [vmem:[#allocation7 + $0x14] sm:$0xf]
    %v773 = vld [vmem:[#allocation7 + $0x18] sm:$0xf]
    %v774 = vld [vmem:[#allocation7 + $0x1c] sm:$0xf]
    %v775 = vld [vmem:[#allocation7 + $0x20] sm:$0xf]
    %v776 = vld [vmem:[#allocation7 + $0x24] sm:$0xf]
    %v777 = vld [vmem:[#allocation7 + $0x28] sm:$0xf]
    %v778 = vld [vmem:[#allocation7 + $0x2c] sm:$0xf]
    %v779 = vld [vmem:[#allocation7 + $0x30] sm:$0xf]
    %v780 = vld [vmem:[#allocation7 + $0x34] sm:$0xf]
    %v781 = vld [vmem:[#allocation7 + $0x38] sm:$0xf]
    %v782 = vld [vmem:[#allocation7 + $0x3c] sm:$0xf]
    %v783 = vpack.c.bf16 %v766, %v766
    %v800 = vunpack.c.l.b16 %v767
    %v801 = vunpack.c.l.b16 %v768
    %v802 = vunpack.c.l.b16 %v769
    %v803 = vunpack.c.l.b16 %v770
    %v804 = vunpack.c.l.b16 %v771
    %v805 = vunpack.c.l.b16 %v772
    %v806 = vunpack.c.l.b16 %v773
    %v807 = vunpack.c.l.b16 %v774
    %v808 = vunpack.c.l.b16 %v775
    %v809 = vunpack.c.l.b16 %v776
    %v810 = vunpack.c.l.b16 %v777
    %v811 = vunpack.c.l.b16 %v778
    %v812 = vunpack.c.l.b16 %v779
    %v813 = vunpack.c.l.b16 %v780
    %v814 = vunpack.c.l.b16 %v781
    %v815 = vunpack.c.l.b16 %v782
    %v816 = vpack.c.b16 %v801, %v800
    %v817 = vpack.c.b16 %v803, %v802
    %v818 = vpack.c.b16 %v805, %v804
    %v819 = vpack.c.b16 %v807, %v806
    %v820 = vpack.c.b16 %v809, %v808
    %v821 = vpack.c.b16 %v811, %v810
    %v822 = vpack.c.b16 %v813, %v812
    %v823 = vpack.c.b16 %v815, %v814
    %832 = vmatprep.subr.bf16.mxu0 0
    %833 = vmatpush1.bf16.msra.mxu0 %v816
    %834 = vmatprep.subr.bf16.mxu0 0
    %835 = vmatpush1.bf16.msra.mxu0 %v817
    %836 = vmatprep.subr.bf16.mxu0 0
    %837 = vmatpush1.bf16.msra.mxu0 %v818
    %838 = vmatprep.subr.bf16.mxu0 0
    %839 = vmatpush1.bf16.msra.mxu0 %v819
    %840 = vmatprep.subr.bf16.mxu0 0
    %841 = vmatpush1.bf16.msra.mxu0 %v820
    %842 = vmatprep.subr.bf16.mxu0 0
    %843 = vmatpush1.bf16.msra.mxu0 %v821
    %844 = vmatprep.subr.bf16.mxu0 0
    %845 = vmatpush1.bf16.msra.mxu0 %v822
    %846 = vmatprep.subr.bf16.mxu0 0
    %847 = vmatpush1.bf16.msra.mxu0 %v823
    %848 = vmatprep.subr.bf16.mxu0 0
    %849 = vmatpush1.bf16.msra.mxu0 0
    %850 = vmatprep.subr.bf16.mxu0 0
    %851 = vmatpush1.bf16.msra.mxu0 0
    %852 = vmatprep.subr.bf16.mxu0 0
    %853 = vmatpush1.bf16.msra.mxu0 0
    %854 = vmatprep.subr.bf16.mxu0 0
    %855 = vmatpush1.bf16.msra.mxu0 0
    %856 = vmatprep.subr.bf16.mxu0 0
    %857 = vmatpush1.bf16.msra.mxu0 0
    %858 = vmatprep.subr.bf16.mxu0 0
    %859 = vmatpush1.bf16.msra.mxu0 0
    %860 = vmatprep.subr.bf16.mxu0 0
    %861 = vmatpush1.bf16.msra.mxu0 0
    %862 = vmatprep.subr.bf16.mxu0 0
    %863 = vmatpush1.bf16.msra.mxu0 0
    %864 = vmatprep.mubr.bf16.mxu0 0
    %865 = vmatmul.mubr.bf16.gmra.mrb[0].mxu0 %v783
    %v866 = vpop.f32.mrb[0].mxu0
    %v867 = vadd.f32 0.0, %v866
    %v868 = vpop.f32.mrb[0].mxu0
    %v869 = vpop.f32.mrb[0].mxu0
    %v870 = vpop.f32.mrb[0].mxu0
    %871 = vdwg.mxu0
    %vm872 = vcmp.gt.f32.partialorder %v867, 0.0
    %v873 = vmul.f32 %v867, 1.442695
    %v874 = vpow.pop %v873
    %v875 = vsub.f32 %v874, 1.0
    %v876 = vsel %vm872, %v867, %v875
    %v877 = vld [vmem:[%s270] sm:$0xf]
    %v878 = vld [vmem:[%s270 + $0x4] sm:$0xf]
    %v879 = vld [vmem:[%s270 + $0x8] sm:$0xf]
    %v880 = vld [vmem:[%s270 + $0xc] sm:$0xf]
    %v881 = vld [vmem:[%s270 + $0x10] sm:$0xf]
    %v882 = vld [vmem:[%s270 + $0x14] sm:$0xf]
    %v883 = vld [vmem:[%s270 + $0x18] sm:$0xf]
    %v884 = vld [vmem:[%s270 + $0x1c] sm:$0xf]
    %v885 = vld [vmem:[%s270 + $0x20] sm:$0xf]
    %v886 = vld [vmem:[%s270 + $0x24] sm:$0xf]
    %v887 = vld [vmem:[%s270 + $0x28] sm:$0xf]
    %v888 = vld [vmem:[%s270 + $0x2c] sm:$0xf]
    %v889 = vld [vmem:[%s270 + $0x30] sm:$0xf]
    %v890 = vld [vmem:[%s270 + $0x34] sm:$0xf]
    %v891 = vld [vmem:[%s270 + $0x38] sm:$0xf]
    %v892 = vld [vmem:[%s270 + $0x3c] sm:$0xf]
    %v893 = vpack.c.bf16 %v876, %v876
    %v910 = vunpack.c.l.b16 %v877
    %v911 = vunpack.c.l.b16 %v878
    %v912 = vunpack.c.l.b16 %v879
    %v913 = vunpack.c.l.b16 %v880
    %v914 = vunpack.c.l.b16 %v881
    %v915 = vunpack.c.l.b16 %v882
    %v916 = vunpack.c.l.b16 %v883
    %v917 = vunpack.c.l.b16 %v884
    %v918 = vunpack.c.l.b16 %v885
    %v919 = vunpack.c.l.b16 %v886
    %v920 = vunpack.c.l.b16 %v887
    %v921 = vunpack.c.l.b16 %v888
    %v922 = vunpack.c.l.b16 %v889
    %v923 = vunpack.c.l.b16 %v890
    %v924 = vunpack.c.l.b16 %v891
    %v925 = vunpack.c.l.b16 %v892
    %v926 = vpack.c.b16 %v911, %v910
    %v927 = vpack.c.b16 %v913, %v912
    %v928 = vpack.c.b16 %v915, %v914
    %v929 = vpack.c.b16 %v917, %v916
    %v930 = vpack.c.b16 %v919, %v918
    %v931 = vpack.c.b16 %v921, %v920
    %v932 = vpack.c.b16 %v923, %v922
    %v933 = vpack.c.b16 %v925, %v924
    %942 = vmatprep.subr.bf16.mxu0 0
    %943 = vmatpush1.bf16.msra.mxu0 %v926
    %944 = vmatprep.subr.bf16.mxu0 0
    %945 = vmatpush1.bf16.msra.mxu0 %v927
    %946 = vmatprep.subr.bf16.mxu0 0
    %947 = vmatpush1.bf16.msra.mxu0 %v928
    %948 = vmatprep.subr.bf16.mxu0 0
    %949 = vmatpush1.bf16.msra.mxu0 %v929
    %950 = vmatprep.subr.bf16.mxu0 0
    %951 = vmatpush1.bf16.msra.mxu0 %v930
    %952 = vmatprep.subr.bf16.mxu0 0
    %953 = vmatpush1.bf16.msra.mxu0 %v931
    %954 = vmatprep.subr.bf16.mxu0 0
    %955 = vmatpush1.bf16.msra.mxu0 %v932
    %956 = vmatprep.subr.bf16.mxu0 0
    %957 = vmatpush1.bf16.msra.mxu0 %v933
    %958 = vmatprep.subr.bf16.mxu0 0
    %959 = vmatpush1.bf16.msra.mxu0 0
    %960 = vmatprep.subr.bf16.mxu0 0
    %961 = vmatpush1.bf16.msra.mxu0 0
    %962 = vmatprep.subr.bf16.mxu0 0
    %963 = vmatpush1.bf16.msra.mxu0 0
    %964 = vmatprep.subr.bf16.mxu0 0
    %965 = vmatpush1.bf16.msra.mxu0 0
    %966 = vmatprep.subr.bf16.mxu0 0
    %967 = vmatpush1.bf16.msra.mxu0 0
    %968 = vmatprep.subr.bf16.mxu0 0
    %969 = vmatpush1.bf16.msra.mxu0 0
    %970 = vmatprep.subr.bf16.mxu0 0
    %971 = vmatpush1.bf16.msra.mxu0 0
    %972 = vmatprep.subr.bf16.mxu0 0
    %973 = vmatpush1.bf16.msra.mxu0 0
    %974 = vmatprep.mubr.bf16.mxu0 0
    %975 = vmatmul.mubr.bf16.gmra.mrb[0].mxu0 %v893
    %v976 = vpop.f32.mrb[0].mxu0
    %v977 = vadd.f32 %v292, %v976
    %v978 = vpop.f32.mrb[0].mxu0
    %v979 = vpop.f32.mrb[0].mxu0
    %v980 = vpop.f32.mrb[0].mxu0
    %981 = vdwg.mxu0
    %vm982 = vcmp.gt.f32.partialorder %v977, 0.0
    %v983 = vmul.f32 %v977, 1.442695
    %v984 = vpow.pop %v983
    %v985 = vsub.f32 %v984, 1.0
    %v986 = vsel %vm982, %v977, %v985
    %v987 = vld [vmem:[%s387] sm:$0xf]
    %v988 = vld [vmem:[%s387 + $0x4] sm:$0xf]
    %v989 = vld [vmem:[%s387 + $0x8] sm:$0xf]
    %v990 = vld [vmem:[%s387 + $0xc] sm:$0xf]
    %v991 = vld [vmem:[%s387 + $0x10] sm:$0xf]
    %v992 = vld [vmem:[%s387 + $0x14] sm:$0xf]
    %v993 = vld [vmem:[%s387 + $0x18] sm:$0xf]
    %v994 = vld [vmem:[%s387 + $0x1c] sm:$0xf]
    %v995 = vld [vmem:[%s387 + $0x20] sm:$0xf]
    %v996 = vld [vmem:[%s387 + $0x24] sm:$0xf]
    %v997 = vld [vmem:[%s387 + $0x28] sm:$0xf]
    %v998 = vld [vmem:[%s387 + $0x2c] sm:$0xf]
    %v999 = vld [vmem:[%s387 + $0x30] sm:$0xf]
    %v1000 = vld [vmem:[%s387 + $0x34] sm:$0xf]
    %v1001 = vld [vmem:[%s387 + $0x38] sm:$0xf]
    %v1002 = vld [vmem:[%s387 + $0x3c] sm:$0xf]
    %v1003 = vpack.c.bf16 %v986, %v986
    %v1020 = vunpack.c.l.b16 %v987
    %v1021 = vunpack.c.l.b16 %v988
    %v1022 = vunpack.c.l.b16 %v989
    %v1023 = vunpack.c.l.b16 %v990
    %v1024 = vunpack.c.l.b16 %v991
    %v1025 = vunpack.c.l.b16 %v992
    %v1026 = vunpack.c.l.b16 %v993
    %v1027 = vunpack.c.l.b16 %v994
    %v1028 = vunpack.c.l.b16 %v995
    %v1029 = vunpack.c.l.b16 %v996
    %v1030 = vunpack.c.l.b16 %v997
    %v1031 = vunpack.c.l.b16 %v998
    %v1032 = vunpack.c.l.b16 %v999
    %v1033 = vunpack.c.l.b16 %v1000
    %v1034 = vunpack.c.l.b16 %v1001
    %v1035 = vunpack.c.l.b16 %v1002
    %v1036 = vpack.c.b16 %v1021, %v1020
    %v1037 = vpack.c.b16 %v1023, %v1022
    %v1038 = vpack.c.b16 %v1025, %v1024
    %v1039 = vpack.c.b16 %v1027, %v1026
    %v1040 = vpack.c.b16 %v1029, %v1028
    %v1041 = vpack.c.b16 %v1031, %v1030
    %v1042 = vpack.c.b16 %v1033, %v1032
    %v1043 = vpack.c.b16 %v1035, %v1034
    %1052 = vmatprep.subr.bf16.mxu0 0
    %1053 = vmatpush1.bf16.msra.mxu0 %v1036
    %1054 = vmatprep.subr.bf16.mxu0 0
    %1055 = vmatpush1.bf16.msra.mxu0 %v1037
    %1056 = vmatprep.subr.bf16.mxu0 0
    %1057 = vmatpush1.bf16.msra.mxu0 %v1038
    %1058 = vmatprep.subr.bf16.mxu0 0
    %1059 = vmatpush1.bf16.msra.mxu0 %v1039
    %1060 = vmatprep.subr.bf16.mxu0 0
    %1061 = vmatpush1.bf16.msra.mxu0 %v1040
    %1062 = vmatprep.subr.bf16.mxu0 0
    %1063 = vmatpush1.bf16.msra.mxu0 %v1041
    %1064 = vmatprep.subr.bf16.mxu0 0
    %1065 = vmatpush1.bf16.msra.mxu0 %v1042
    %1066 = vmatprep.subr.bf16.mxu0 0
    %1067 = vmatpush1.bf16.msra.mxu0 %v1043
    %1068 = vmatprep.subr.bf16.mxu0 0
    %1069 = vmatpush1.bf16.msra.mxu0 0
    %1070 = vmatprep.subr.bf16.mxu0 0
    %1071 = vmatpush1.bf16.msra.mxu0 0
    %1072 = vmatprep.subr.bf16.mxu0 0
    %1073 = vmatpush1.bf16.msra.mxu0 0
    %1074 = vmatprep.subr.bf16.mxu0 0
    %1075 = vmatpush1.bf16.msra.mxu0 0
    %1076 = vmatprep.subr.bf16.mxu0 0
    %1077 = vmatpush1.bf16.msra.mxu0 0
    %1078 = vmatprep.subr.bf16.mxu0 0
    %1079 = vmatpush1.bf16.msra.mxu0 0
    %1080 = vmatprep.subr.bf16.mxu0 0
    %1081 = vmatpush1.bf16.msra.mxu0 0
    %1082 = vmatprep.subr.bf16.mxu0 0
    %1083 = vmatpush1.bf16.msra.mxu0 0
    %1084 = vmatprep.mubr.bf16.mxu0 0
    %1085 = vmatmul.mubr.bf16.gmra.mrb[0].mxu0 %v1003
    %v1086 = vpop.f32.mrb[0].mxu0
    %v1087 = vadd.f32 0.0, %v1086
    %v1088 = vpop.f32.mrb[0].mxu0
    %v1089 = vpop.f32.mrb[0].mxu0
    %v1090 = vpop.f32.mrb[0].mxu0
    %1091 = vdwg.mxu0
    %vm1092 = vcmp.gt.f32.partialorder %v1087, 0.0
    %v1093 = vmul.f32 %v1087, 1.442695
    %v1094 = vpow.pop %v1093
    %v1095 = vsub.f32 %v1094, 1.0
    %v1096 = vsel %vm1092, %v1087, %v1095
    %v1097 = vld [vmem:[%s498] sm:$0xf]
    %v1098 = vld [vmem:[%s498 + $0x4] sm:$0xf]
    %v1099 = vld [vmem:[%s498 + $0x8] sm:$0xf]
    %v1100 = vld [vmem:[%s498 + $0xc] sm:$0xf]
    %v1101 = vld [vmem:[%s498 + $0x10] sm:$0xf]
    %v1102 = vld [vmem:[%s498 + $0x14] sm:$0xf]
    %v1103 = vld [vmem:[%s498 + $0x18] sm:$0xf]
    %v1104 = vld [vmem:[%s498 + $0x1c] sm:$0xf]
    %v1105 = vld [vmem:[%s498 + $0x20] sm:$0xf]
    %v1106 = vld [vmem:[%s498 + $0x24] sm:$0xf]
    %v1107 = vld [vmem:[%s498 + $0x28] sm:$0xf]
    %v1108 = vld [vmem:[%s498 + $0x2c] sm:$0xf]
    %v1109 = vld [vmem:[%s498 + $0x30] sm:$0xf]
    %v1110 = vld [vmem:[%s498 + $0x34] sm:$0xf]
    %v1111 = vld [vmem:[%s498 + $0x38] sm:$0xf]
    %v1112 = vld [vmem:[%s498 + $0x3c] sm:$0xf]
    %v1113 = vpack.c.bf16 %v1096, %v1096
    %v1130 = vunpack.c.l.b16 %v1097
    %v1131 = vunpack.c.l.b16 %v1098
    %v1132 = vunpack.c.l.b16 %v1099
    %v1133 = vunpack.c.l.b16 %v1100
    %v1134 = vunpack.c.l.b16 %v1101
    %v1135 = vunpack.c.l.b16 %v1102
    %v1136 = vunpack.c.l.b16 %v1103
    %v1137 = vunpack.c.l.b16 %v1104
    %v1138 = vunpack.c.l.b16 %v1105
    %v1139 = vunpack.c.l.b16 %v1106
    %v1140 = vunpack.c.l.b16 %v1107
    %v1141 = vunpack.c.l.b16 %v1108
    %v1142 = vunpack.c.l.b16 %v1109
    %v1143 = vunpack.c.l.b16 %v1110
    %v1144 = vunpack.c.l.b16 %v1111
    %v1145 = vunpack.c.l.b16 %v1112
    %v1146 = vpack.c.b16 %v1131, %v1130
    %v1147 = vpack.c.b16 %v1133, %v1132
    %v1148 = vpack.c.b16 %v1135, %v1134
    %v1149 = vpack.c.b16 %v1137, %v1136
    %v1150 = vpack.c.b16 %v1139, %v1138
    %v1151 = vpack.c.b16 %v1141, %v1140
    %v1152 = vpack.c.b16 %v1143, %v1142
    %v1153 = vpack.c.b16 %v1145, %v1144
    %1162 = vmatprep.subr.bf16.mxu0 0
    %1163 = vmatpush1.bf16.msra.mxu0 %v1146
    %1164 = vmatprep.subr.bf16.mxu0 0
    %1165 = vmatpush1.bf16.msra.mxu0 %v1147
    %1166 = vmatprep.subr.bf16.mxu0 0
    %1167 = vmatpush1.bf16.msra.mxu0 %v1148
    %1168 = vmatprep.subr.bf16.mxu0 0
    %1169 = vmatpush1.bf16.msra.mxu0 %v1149
    %1170 = vmatprep.subr.bf16.mxu0 0
    %1171 = vmatpush1.bf16.msra.mxu0 %v1150
    %1172 = vmatprep.subr.bf16.mxu0 0
    %1173 = vmatpush1.bf16.msra.mxu0 %v1151
    %1174 = vmatprep.subr.bf16.mxu0 0
    %1175 = vmatpush1.bf16.msra.mxu0 %v1152
    %1176 = vmatprep.subr.bf16.mxu0 0
    %1177 = vmatpush1.bf16.msra.mxu0 %v1153
    %1178 = vmatprep.subr.bf16.mxu0 0
    %1179 = vmatpush1.bf16.msra.mxu0 0
    %1180 = vmatprep.subr.bf16.mxu0 0
    %1181 = vmatpush1.bf16.msra.mxu0 0
    %1182 = vmatprep.subr.bf16.mxu0 0
    %1183 = vmatpush1.bf16.msra.mxu0 0
    %1184 = vmatprep.subr.bf16.mxu0 0
    %1185 = vmatpush1.bf16.msra.mxu0 0
    %1186 = vmatprep.subr.bf16.mxu0 0
    %1187 = vmatpush1.bf16.msra.mxu0 0
    %1188 = vmatprep.subr.bf16.mxu0 0
    %1189 = vmatpush1.bf16.msra.mxu0 0
    %1190 = vmatprep.subr.bf16.mxu0 0
    %1191 = vmatpush1.bf16.msra.mxu0 0
    %1192 = vmatprep.subr.bf16.mxu0 0
    %1193 = vmatpush1.bf16.msra.mxu0 0
    %1194 = vmatprep.mubr.bf16.mxu0 0
    %1195 = vmatmul.mubr.bf16.gmra.mrb[0].mxu0 %v1113
    %v1196 = vpop.f32.mrb[0].mxu0
    %v1197 = vadd.f32 0.0, %v1196
    %v1198 = vpop.f32.mrb[0].mxu0
    %v1199 = vpop.f32.mrb[0].mxu0
    %v1200 = vpop.f32.mrb[0].mxu0
    %1201 = vdwg.mxu0
    %vm1202 = vcmp.gt.f32.partialorder %v1197, 0.0
    %v1203 = vmul.f32 %v1197, 1.442695
    %v1204 = vpow.pop %v1203
    %v1205 = vsub.f32 %v1204, 1.0
    %v1206 = vsel %vm1202, %v1197, %v1205
    %v1207 = vld [vmem:[%s609] sm:$0xf]
    %v1208 = vld [vmem:[%s609 + $0x4] sm:$0xf]
    %v1209 = vld [vmem:[%s609 + $0x8] sm:$0xf]
    %v1210 = vld [vmem:[%s609 + $0xc] sm:$0xf]
    %v1211 = vld [vmem:[%s609 + $0x10] sm:$0xf]
    %v1212 = vld [vmem:[%s609 + $0x14] sm:$0xf]
    %v1213 = vld [vmem:[%s609 + $0x18] sm:$0xf]
    %v1214 = vld [vmem:[%s609 + $0x1c] sm:$0xf]
    %v1215 = vld [vmem:[%s609 + $0x20] sm:$0xf]
    %v1216 = vld [vmem:[%s609 + $0x24] sm:$0xf]
    %v1217 = vld [vmem:[%s609 + $0x28] sm:$0xf]
    %v1218 = vld [vmem:[%s609 + $0x2c] sm:$0xf]
    %v1219 = vld [vmem:[%s609 + $0x30] sm:$0xf]
    %v1220 = vld [vmem:[%s609 + $0x34] sm:$0xf]
    %v1221 = vld [vmem:[%s609 + $0x38] sm:$0xf]
    %v1222 = vld [vmem:[%s609 + $0x3c] sm:$0xf]
    %v1223 = vpack.c.bf16 %v1206, %v1206
    %v1240 = vunpack.c.l.b16 %v1207
    %v1241 = vunpack.c.l.b16 %v1208
    %v1242 = vunpack.c.l.b16 %v1209
    %v1243 = vunpack.c.l.b16 %v1210
    %v1244 = vunpack.c.l.b16 %v1211
    %v1245 = vunpack.c.l.b16 %v1212
    %v1246 = vunpack.c.l.b16 %v1213
    %v1247 = vunpack.c.l.b16 %v1214
    %v1248 = vunpack.c.l.b16 %v1215
    %v1249 = vunpack.c.l.b16 %v1216
    %v1250 = vunpack.c.l.b16 %v1217
    %v1251 = vunpack.c.l.b16 %v1218
    %v1252 = vunpack.c.l.b16 %v1219
    %v1253 = vunpack.c.l.b16 %v1220
    %v1254 = vunpack.c.l.b16 %v1221
    %v1255 = vunpack.c.l.b16 %v1222
    %v1256 = vpack.c.b16 %v1241, %v1240
    %v1257 = vpack.c.b16 %v1243, %v1242
    %v1258 = vpack.c.b16 %v1245, %v1244
    %v1259 = vpack.c.b16 %v1247, %v1246
    %v1260 = vpack.c.b16 %v1249, %v1248
    %v1261 = vpack.c.b16 %v1251, %v1250
    %v1262 = vpack.c.b16 %v1253, %v1252
    %v1263 = vpack.c.b16 %v1255, %v1254
    %1272 = vmatprep.subr.bf16.mxu0 0
    %1273 = vmatpush1.bf16.msra.mxu0 %v1256
    %1274 = vmatprep.subr.bf16.mxu0 0
    %1275 = vmatpush1.bf16.msra.mxu0 %v1257
    %1276 = vmatprep.subr.bf16.mxu0 0
    %1277 = vmatpush1.bf16.msra.mxu0 %v1258
    %1278 = vmatprep.subr.bf16.mxu0 0
    %1279 = vmatpush1.bf16.msra.mxu0 %v1259
    %1280 = vmatprep.subr.bf16.mxu0 0
    %1281 = vmatpush1.bf16.msra.mxu0 %v1260
    %1282 = vmatprep.subr.bf16.mxu0 0
    %1283 = vmatpush1.bf16.msra.mxu0 %v1261
    %1284 = vmatprep.subr.bf16.mxu0 0
    %1285 = vmatpush1.bf16.msra.mxu0 %v1262
    %1286 = vmatprep.subr.bf16.mxu0 0
    %1287 = vmatpush1.bf16.msra.mxu0 %v1263
    %1288 = vmatprep.subr.bf16.mxu0 0
    %1289 = vmatpush1.bf16.msra.mxu0 0
    %1290 = vmatprep.subr.bf16.mxu0 0
    %1291 = vmatpush1.bf16.msra.mxu0 0
    %1292 = vmatprep.subr.bf16.mxu0 0
    %1293 = vmatpush1.bf16.msra.mxu0 0
    %1294 = vmatprep.subr.bf16.mxu0 0
    %1295 = vmatpush1.bf16.msra.mxu0 0
    %1296 = vmatprep.subr.bf16.mxu0 0
    %1297 = vmatpush1.bf16.msra.mxu0 0
    %1298 = vmatprep.subr.bf16.mxu0 0
    %1299 = vmatpush1.bf16.msra.mxu0 0
    %1300 = vmatprep.subr.bf16.mxu0 0
    %1301 = vmatpush1.bf16.msra.mxu0 0
    %1302 = vmatprep.subr.bf16.mxu0 0
    %1303 = vmatpush1.bf16.msra.mxu0 0
    %1304 = vmatprep.mubr.bf16.mxu0 0
    %1305 = vmatmul.mubr.bf16.gmra.mrb[0].mxu0 %v1223
    %v1306 = vpop.f32.mrb[0].mxu0
    %v1307 = vadd.f32 0.0, %v1306
    %v1308 = vpop.f32.mrb[0].mxu0
    %v1309 = vpop.f32.mrb[0].mxu0
    %v1310 = vpop.f32.mrb[0].mxu0
    %1311 = vdwg.mxu0
    %v1312 = vadd.f32 %v1206, %v1307
    %1313 = vst [vmem:[#allocation8 + $0x8] sm:$0xff] %v1312
    // Predicated region
    $region30: #{tpu_custom_call.1} parent=1 // pred_check
      _
    $region31: #{tpu_custom_call.1} parent=1 // pred_check_branch
      %1315 = sbr.rel (0) target = $region33
    $region32: #{tpu_custom_call.1} parent=1 // pred_region
      %s1317 = ssub.s32 256, 256
      %1318 = vsyncadd [#allocation4], %s1317
      %s1319 = sshll.u32 [#allocation8], 4
      %s1320 = int_to_ptr.vmem [resolvable:$true] %s1319
      %1325 = dma.vmem_to_hbm [thread:$0]  %s1320, 256, %s4, [#allocation4], 128, 128, 8
    $region33: #{tpu_custom_call.1} parent=1 // pred_fallthru
      _
    // Predicated region
    $region34: #{tpu_custom_call.1} parent=1 // pred_check
      _
    $region35: #{tpu_custom_call.1} parent=1 // pred_check_branch
      %1327 = sbr.rel (0) target = $region37
    $region36: #{tpu_custom_call.1} parent=1 // pred_region
      %1328 = dma.done [#allocation4], 256
    $region37: #{tpu_custom_call.1} parent=1 // pred_fallthru
      _
    %1329 = vsyncpa [#allocation3], 1
    %1330 = vsyncpa [#allocation6], 1
    %1331 = vsyncpa [#allocation4], 1

</llo_original>
